<compile_context>
chip_gen: v5e
topology: v5e:2x2
jax: 0.10.0
libtpu: 0.0.40
codegen_flags: <defaults>
</compile_context>

<pallas_src>
import functools

import jax
import jax.numpy as jnp
from jax.experimental import pallas as pl
from jax.experimental.pallas import tpu as pltpu


def _ceil_div(a, b):
    return -(-a // b)


def _conv_stats_kernel(x_ref, w_ref, mask_ref, conv_ref, psum_ref, psumsq_ref,
                       *, kh, kw, sh, sw, Ho, Wo, Wph):
    """One grid step = one batch image.

    x_ref:    (sh*sw, 1, Hph*Wph, Cin)  stride-phase split, spatially padded NHWC input (flattened)
    w_ref:    (kh*kw, Cin, Cp)          per-tap weights (groups folded block-diagonally), Cp = pad128(Cout)
    mask_ref: (Lo, 1)                   1.0 on valid output columns, 0.0 on the (Wph - Wo) junk columns
    conv_ref: (1, Lo, Cp)               raw conv rows, lane dim = Cp (128-multiple, unmasked stores)
    psum_ref / psumsq_ref: (1, 1, Cp)   per-image channel sum / sum-of-squares for BatchNorm
    """
    Lo = Ho * Wph
    Cp = conv_ref.shape[-1]
    acc = jnp.zeros((Lo, Cp), jnp.float32)
    # Shift-and-accumulate conv: one MXU matmul per kernel tap; each tap is a contiguous,
    # static row-slice of the flattened padded image (no reshapes inside the kernel).
    for ki in range(kh):
        for kj in range(kw):
            p = (ki % sh) * sw + (kj % sw)
            start = (ki // sh) * Wph + (kj // sw)
            xs = x_ref[p, 0, start:start + Lo, :]                    # (Lo, Cin)
            acc = acc + jnp.dot(xs, w_ref[ki * kw + kj],
                                preferred_element_type=jnp.float32)
    conv_ref[0] = acc
    am = acc * mask_ref[...]                                         # zero out junk columns
    psum_ref[0] = am.sum(axis=0, keepdims=True)
    psumsq_ref[0] = (am * am).sum(axis=0, keepdims=True)


def _bn_silu_kernel(x_ref, scale_ref, shift_ref, o_ref):
    """Streaming BN-apply + SiLU.  scale/shift are precomputed per channel (hoisted)."""
    y = x_ref[0] * scale_ref[...] + shift_ref[...]                   # (Lo, Cp) fused scale+shift
    # SiLU = y * sigmoid(y).  pl.reciprocal keeps the divide off the VALU; approx=True is
    # possible when tolerance allows.
    o_ref[0] = y * pl.reciprocal(1.0 + jnp.exp(-y))


def cnn_block_forward(x, weight, gamma, beta, *, stride, padding, groups, eps=1e-5):
    """x: (N, Cin, H, W) NCHW;  weight: (Cout, Cin//groups, kh, kw) OIHW (PyTorch)."""
    N, Cin, H, W = x.shape
    Cout, Cin_g, kh, kw = weight.shape
    G = groups
    assert Cin_g * G == Cin and Cout % G == 0
    Cg = Cout // G
    sh = sw = int(stride)
    ph = pw = int(padding)
    Hp, Wp = H + 2 * ph, W + 2 * pw
    Ho = (Hp - kh) // sh + 1
    Wo = (Wp - kw) // sw + 1

    # Padded-phase geometry: Wph/Hph chosen so every (ki, kj) tap is a contiguous row-slice
    # of the flattened (Hph*Wph) image; the extra (Wph - Wo) columns per row are junk that is
    # masked out of the statistics and dropped at the end.
    Wph = max(Wo + (kw - 1) // sw, _ceil_div(Wp, sw))
    Hph = max(Ho + (kh - 1) // sh + 1, _ceil_div(Hp, sh))
    Lo = Ho * Wph
    M = N * Ho * Wo                                    # valid elements per channel (BN count)
    Cp = _ceil_div(Cout, 128) * 128                    # lane-dense channel axis

    dtype_mm = jnp.float32   # NOTE: bf16 here (keep f32 accumulation) once tolerance allows.

    # ---- input prep: NHWC, spatial zero-pad, stride-phase split, flatten (O(|x|), once) ----
    xh = jnp.transpose(x, (0, 2, 3, 1)).astype(dtype_mm)                       # (N,H,W,Cin)
    xp = jnp.pad(xh, ((0, 0), (ph, sh * Hph - H - ph),
                      (pw, sw * Wph - W - pw), (0, 0)))                        # (N,sh*Hph,sw*Wph,Cin)
    xp = xp.reshape(N, Hph, sh, Wph, sw, Cin)
    xp = jnp.transpose(xp, (2, 4, 0, 1, 3, 5)).reshape(sh * sw, N, Hph * Wph, Cin)

    # ---- weights: per-tap (Cin, Cp); groups folded as a block-diagonal matrix ----
    wt = jnp.transpose(weight.astype(dtype_mm), (2, 3, 1, 0))                  # (kh,kw,Cin_g,Cout)
    if G == 1:
        wfull = wt                                                             # (kh,kw,Cin,Cout)
    else:
        # TODO(synk): grouped/depthwise convs pay G x extra MXU flops through this
        # block-diagonal weight; a dedicated VPU depthwise kernel would be better for Cg == 1.
        wfull = jnp.zeros((kh, kw, Cin, Cout), dtype_mm)
        for g in range(G):
            wfull = wfull.at[:, :, g * Cin_g:(g + 1) * Cin_g,
                             g * Cg:(g + 1) * Cg].set(wt[:, :, :, g * Cg:(g + 1) * Cg])
    wfull = jnp.pad(wfull, ((0, 0), (0, 0), (0, 0), (0, Cp - Cout)))
    wfull = wfull.reshape(kh * kw, Cin, Cp)

    # valid-column mask for BN statistics (junk columns ow >= Wo excluded)
    col = jnp.arange(Lo, dtype=jnp.int32) % Wph
    mask = (col < Wo).astype(jnp.float32).reshape(Lo, 1)

    kern1 = functools.partial(_conv_stats_kernel, kh=kh, kw=kw, sh=sh, sw=sw,
                              Ho=Ho, Wo=Wo, Wph=Wph)

    # ---- kernel 1: shift-and-accumulate conv + per-image BN partial statistics ----
    conv_out, psum, psumsq = pl.pallas_call(
        kern1,
        out_shape=(jax.ShapeDtypeStruct((N, Lo, Cp), jnp.float32),
                   jax.ShapeDtypeStruct((N, 1, Cp), jnp.float32),
                   jax.ShapeDtypeStruct((N, 1, Cp), jnp.float32)),
        grid_spec=pltpu.PrefetchScalarGridSpec(
            num_scalar_prefetch=0,
            grid=(N,),
            in_specs=[pl.BlockSpec((sh * sw, 1, Hph * Wph, Cin), lambda n: (0, n, 0, 0)),
                      pl.BlockSpec((kh * kw, Cin, Cp), lambda n: (0, 0, 0)),
                      pl.BlockSpec((Lo, 1), lambda n: (0, 0))],
            out_specs=(pl.BlockSpec((1, Lo, Cp), lambda n: (n, 0, 0)),
                       pl.BlockSpec((1, 1, Cp), lambda n: (n, 0, 0)),
                       pl.BlockSpec((1, 1, Cp), lambda n: (n, 0, 0)))),
        compiler_params=pltpu.CompilerParams(
            dimension_semantics=("parallel",),            # batch axis is independent (v7x 2 TCs)
            vmem_limit_bytes=32 * 1024 * 1024),
    )(xp, wfull, mask)

    # ---- BN parameters: tiny per-channel math, hoisted out of the elementwise kernel ----
    csum = psum.sum(axis=0).reshape(Cp)
    csumsq = psumsq.sum(axis=0).reshape(Cp)
    mean = csum / M
    var = jnp.maximum(csumsq / M - mean * mean, 0.0)       # biased var, clamped vs. cancellation
    rstd = jax.lax.rsqrt(var + eps)
    gamma_p = jnp.pad(gamma.astype(jnp.float32), (0, Cp - Cout))
    beta_p = jnp.pad(beta.astype(jnp.float32), (0, Cp - Cout))
    scale = (gamma_p * rstd).reshape(1, Cp)
    shift = (beta_p - mean * gamma_p * rstd).reshape(1, Cp)

    # ---- kernel 2: streaming BN apply + SiLU ----
    y = pl.pallas_call(
        _bn_silu_kernel,
        out_shape=jax.ShapeDtypeStruct((N, Lo, Cp), jnp.float32),
        grid_spec=pltpu.PrefetchScalarGridSpec(
            num_scalar_prefetch=0,
            grid=(N,),
            in_specs=[pl.BlockSpec((1, Lo, Cp), lambda n: (n, 0, 0)),
                      pl.BlockSpec((1, Cp), lambda n: (0, 0)),
                      pl.BlockSpec((1, Cp), lambda n: (0, 0))],
            out_specs=pl.BlockSpec((1, Lo, Cp), lambda n: (n, 0, 0))),
        compiler_params=pltpu.CompilerParams(
            dimension_semantics=("parallel",),
            vmem_limit_bytes=32 * 1024 * 1024),
    )(conv_out, scale, shift)

    # ---- final layout: drop junk columns / channel padding, NHWC -> NCHW (caller contract) ----
    y = y.reshape(N, Ho, Wph, Cp)[:, :, :Wo, :Cout]
    return jnp.transpose(y, (0, 3, 1, 2))                  # (N, Cout, Ho, Wo)


def reference_forward(x, weight, gamma, beta, *, stride, padding, groups, eps=1e-5):
    conv = jax.lax.conv_general_dilated(
        x.astype(jnp.float32), weight.astype(jnp.float32),
        window_strides=(stride, stride),
        padding=[(padding, padding), (padding, padding)],
        dimension_numbers=("NCHW", "OIHW", "NCHW"),
        feature_group_count=groups)
    mean = conv.mean(axis=(0, 2, 3), keepdims=True)
    var = conv.var(axis=(0, 2, 3), keepdims=True)          # biased variance
    xn = (conv - mean) * jax.lax.rsqrt(var + eps)
    y = xn * gamma.reshape(1, -1, 1, 1) + beta.reshape(1, -1, 1, 1)
    return y * jax.nn.sigmoid(y)


if __name__ == "__main__":
    # Small CnnBlock: in_channels=4, out_channels=8, kernel_size=3, stride=1, padding=1, groups=1
    N, Cin, H, W = 2, 4, 16, 16
    Cout, K, stride, padding, groups = 8, 3, 1, 1, 1

    key = jax.random.PRNGKey(0)
    kx, kw_, kg, kb = jax.random.split(key, 4)
    x = jax.random.normal(kx, (N, Cin, H, W), dtype=jnp.float32)
    weight = 0.1 * jax.random.normal(kw_, (Cout, Cin // groups, K, K), dtype=jnp.float32)
    gamma = 1.0 + 0.1 * jax.random.normal(kg, (Cout,), dtype=jnp.float32)
    beta = 0.1 * jax.random.normal(kb, (Cout,), dtype=jnp.float32)

    out = cnn_block_forward(x, weight, gamma, beta,
                            stride=stride, padding=padding, groups=groups)
    out = jax.block_until_ready(out)

    ref = reference_forward(x, weight, gamma, beta,
                            stride=stride, padding=padding, groups=groups)
    assert out.shape == ref.shape == (N, Cout, H, W), (out.shape, ref.shape)
    assert jnp.allclose(out, ref, atol=1e-3, rtol=1e-3), float(jnp.max(jnp.abs(out - ref)))

    print("KERNEL_OK")
</pallas_src>

<mosaic_0001>
module attributes {stable_mosaic.version = 11 : i64} {
  func.func @_conv_stats_kernel(%arg0: i32, %arg1: memref<1x1x342x4xf32, #tpu.memory_space<vmem>>, %arg2: memref<9x4x128xf32, #tpu.memory_space<vmem>>, %arg3: memref<288x1xf32, #tpu.memory_space<vmem>>, %arg4: memref<1x288x128xf32, #tpu.memory_space<vmem>>, %arg5: memref<1x1x128xf32, #tpu.memory_space<vmem>>, %arg6: memref<1x1x128xf32, #tpu.memory_space<vmem>>) attributes {dimension_semantics = [#tpu.dimension_semantics<parallel>], iteration_bounds = array<i64: 2>, scalar_prefetch = 0 : i64, scratch_operands = 0 : i64, tpu.core_type = #tpu.core_type<tc>, window_params = [{transform_indices = @transform_0, window_bounds = array<i64: 1, 1, 342, 4>}, {pipeline_mode = #tpu.pipeline_mode<synchronous>, transform_indices = @transform_1, window_bounds = array<i64: 9, 4, 128>}, {pipeline_mode = #tpu.pipeline_mode<synchronous>, transform_indices = @transform_2, window_bounds = array<i64: 288, 1>}, {transform_indices = @transform_3, window_bounds = array<i64: 1, 288, 128>}, {transform_indices = @transform_4, window_bounds = array<i64: 1, 1, 128>}, {transform_indices = @transform_5, window_bounds = array<i64: 1, 1, 128>}]} {
    %cst = arith.constant 0.000000e+00 : f32
    %0 = vector.broadcast %cst : f32 to vector<288x128xf32>
    %c0 = arith.constant 0 : index
    %c0_0 = arith.constant 0 : index
    %c0_1 = arith.constant 0 : index
    %c0_2 = arith.constant 0 : index
    %1 = vector.load %arg1[%c0, %c0_0, %c0_1, %c0_2] : memref<1x1x342x4xf32, #tpu.memory_space<vmem>>, vector<1x1x288x4xf32>
    %2 = vector.shape_cast %1 : vector<1x1x288x4xf32> to vector<288x4xf32>
    %c0_3 = arith.constant 0 : index
    %c0_4 = arith.constant 0 : index
    %c0_5 = arith.constant 0 : index
    %3 = vector.load %arg2[%c0_3, %c0_4, %c0_5] : memref<9x4x128xf32, #tpu.memory_space<vmem>>, vector<1x4x128xf32>
    %4 = vector.shape_cast %3 : vector<1x4x128xf32> to vector<4x128xf32>
    %cst_6 = arith.constant dense<0.000000e+00> : vector<288x128xf32>
    %5 = tpu.matmul %2, %4, %cst_6 {dimension_numbers = #tpu.dot_dimension_numbers<[1], [0], [0], [1], [0, 0, 1, 1], [], []>} : vector<288x4xf32>, vector<4x128xf32>, vector<288x128xf32> -> vector<288x128xf32>
    %6 = arith.addf %0, %5 : vector<288x128xf32>
    %c0_7 = arith.constant 0 : index
    %c0_8 = arith.constant 0 : index
    %c1 = arith.constant 1 : index
    %c0_9 = arith.constant 0 : index
    %7 = vector.load %arg1[%c0_7, %c0_8, %c1, %c0_9] : memref<1x1x342x4xf32, #tpu.memory_space<vmem>>, vector<1x1x288x4xf32>
    %8 = vector.shape_cast %7 : vector<1x1x288x4xf32> to vector<288x4xf32>
    %c1_10 = arith.constant 1 : index
    %c0_11 = arith.constant 0 : index
    %c0_12 = arith.constant 0 : index
    %9 = vector.load %arg2[%c1_10, %c0_11, %c0_12] : memref<9x4x128xf32, #tpu.memory_space<vmem>>, vector<1x4x128xf32>
    %10 = vector.shape_cast %9 : vector<1x4x128xf32> to vector<4x128xf32>
    %cst_13 = arith.constant dense<0.000000e+00> : vector<288x128xf32>
    %11 = tpu.matmul %8, %10, %cst_13 {dimension_numbers = #tpu.dot_dimension_numbers<[1], [0], [0], [1], [0, 0, 1, 1], [], []>} : vector<288x4xf32>, vector<4x128xf32>, vector<288x128xf32> -> vector<288x128xf32>
    %12 = arith.addf %6, %11 : vector<288x128xf32>
    %c0_14 = arith.constant 0 : index
    %c0_15 = arith.constant 0 : index
    %c2 = arith.constant 2 : index
    %c0_16 = arith.constant 0 : index
    %13 = vector.load %arg1[%c0_14, %c0_15, %c2, %c0_16] : memref<1x1x342x4xf32, #tpu.memory_space<vmem>>, vector<1x1x288x4xf32>
    %14 = vector.shape_cast %13 : vector<1x1x288x4xf32> to vector<288x4xf32>
    %c2_17 = arith.constant 2 : index
    %c0_18 = arith.constant 0 : index
    %c0_19 = arith.constant 0 : index
    %15 = vector.load %arg2[%c2_17, %c0_18, %c0_19] : memref<9x4x128xf32, #tpu.memory_space<vmem>>, vector<1x4x128xf32>
    %16 = vector.shape_cast %15 : vector<1x4x128xf32> to vector<4x128xf32>
    %cst_20 = arith.constant dense<0.000000e+00> : vector<288x128xf32>
    %17 = tpu.matmul %14, %16, %cst_20 {dimension_numbers = #tpu.dot_dimension_numbers<[1], [0], [0], [1], [0, 0, 1, 1], [], []>} : vector<288x4xf32>, vector<4x128xf32>, vector<288x128xf32> -> vector<288x128xf32>
    %18 = arith.addf %12, %17 : vector<288x128xf32>
    %c0_21 = arith.constant 0 : index
    %c0_22 = arith.constant 0 : index
    %c18 = arith.constant 18 : index
    %c0_23 = arith.constant 0 : index
    %19 = vector.load %arg1[%c0_21, %c0_22, %c18, %c0_23] : memref<1x1x342x4xf32, #tpu.memory_space<vmem>>, vector<1x1x288x4xf32>
    %20 = vector.shape_cast %19 : vector<1x1x288x4xf32> to vector<288x4xf32>
    %c3 = arith.constant 3 : index
    %c0_24 = arith.constant 0 : index
    %c0_25 = arith.constant 0 : index
    %21 = vector.load %arg2[%c3, %c0_24, %c0_25] : memref<9x4x128xf32, #tpu.memory_space<vmem>>, vector<1x4x128xf32>
    %22 = vector.shape_cast %21 : vector<1x4x128xf32> to vector<4x128xf32>
    %cst_26 = arith.constant dense<0.000000e+00> : vector<288x128xf32>
    %23 = tpu.matmul %20, %22, %cst_26 {dimension_numbers = #tpu.dot_dimension_numbers<[1], [0], [0], [1], [0, 0, 1, 1], [], []>} : vector<288x4xf32>, vector<4x128xf32>, vector<288x128xf32> -> vector<288x128xf32>
    %24 = arith.addf %18, %23 : vector<288x128xf32>
    %c0_27 = arith.constant 0 : index
    %c0_28 = arith.constant 0 : index
    %c19 = arith.constant 19 : index
    %c0_29 = arith.constant 0 : index
    %25 = vector.load %arg1[%c0_27, %c0_28, %c19, %c0_29] : memref<1x1x342x4xf32, #tpu.memory_space<vmem>>, vector<1x1x288x4xf32>
    %26 = vector.shape_cast %25 : vector<1x1x288x4xf32> to vector<288x4xf32>
    %c4 = arith.constant 4 : index
    %c0_30 = arith.constant 0 : index
    %c0_31 = arith.constant 0 : index
    %27 = vector.load %arg2[%c4, %c0_30, %c0_31] : memref<9x4x128xf32, #tpu.memory_space<vmem>>, vector<1x4x128xf32>
    %28 = vector.shape_cast %27 : vector<1x4x128xf32> to vector<4x128xf32>
    %cst_32 = arith.constant dense<0.000000e+00> : vector<288x128xf32>
    %29 = tpu.matmul %26, %28, %cst_32 {dimension_numbers = #tpu.dot_dimension_numbers<[1], [0], [0], [1], [0, 0, 1, 1], [], []>} : vector<288x4xf32>, vector<4x128xf32>, vector<288x128xf32> -> vector<288x128xf32>
    %30 = arith.addf %24, %29 : vector<288x128xf32>
    %c0_33 = arith.constant 0 : index
    %c0_34 = arith.constant 0 : index
    %c20 = arith.constant 20 : index
    %c0_35 = arith.constant 0 : index
    %31 = vector.load %arg1[%c0_33, %c0_34, %c20, %c0_35] : memref<1x1x342x4xf32, #tpu.memory_space<vmem>>, vector<1x1x288x4xf32>
    %32 = vector.shape_cast %31 : vector<1x1x288x4xf32> to vector<288x4xf32>
    %c5 = arith.constant 5 : index
    %c0_36 = arith.constant 0 : index
    %c0_37 = arith.constant 0 : index
    %33 = vector.load %arg2[%c5, %c0_36, %c0_37] : memref<9x4x128xf32, #tpu.memory_space<vmem>>, vector<1x4x128xf32>
    %34 = vector.shape_cast %33 : vector<1x4x128xf32> to vector<4x128xf32>
    %cst_38 = arith.constant dense<0.000000e+00> : vector<288x128xf32>
    %35 = tpu.matmul %32, %34, %cst_38 {dimension_numbers = #tpu.dot_dimension_numbers<[1], [0], [0], [1], [0, 0, 1, 1], [], []>} : vector<288x4xf32>, vector<4x128xf32>, vector<288x128xf32> -> vector<288x128xf32>
    %36 = arith.addf %30, %35 : vector<288x128xf32>
    %c0_39 = arith.constant 0 : index
    %c0_40 = arith.constant 0 : index
    %c36 = arith.constant 36 : index
    %c0_41 = arith.constant 0 : index
    %37 = vector.load %arg1[%c0_39, %c0_40, %c36, %c0_41] : memref<1x1x342x4xf32, #tpu.memory_space<vmem>>, vector<1x1x288x4xf32>
    %38 = vector.shape_cast %37 : vector<1x1x288x4xf32> to vector<288x4xf32>
    %c6 = arith.constant 6 : index
    %c0_42 = arith.constant 0 : index
    %c0_43 = arith.constant 0 : index
    %39 = vector.load %arg2[%c6, %c0_42, %c0_43] : memref<9x4x128xf32, #tpu.memory_space<vmem>>, vector<1x4x128xf32>
    %40 = vector.shape_cast %39 : vector<1x4x128xf32> to vector<4x128xf32>
    %cst_44 = arith.constant dense<0.000000e+00> : vector<288x128xf32>
    %41 = tpu.matmul %38, %40, %cst_44 {dimension_numbers = #tpu.dot_dimension_numbers<[1], [0], [0], [1], [0, 0, 1, 1], [], []>} : vector<288x4xf32>, vector<4x128xf32>, vector<288x128xf32> -> vector<288x128xf32>
    %42 = arith.addf %36, %41 : vector<288x128xf32>
    %c0_45 = arith.constant 0 : index
    %c0_46 = arith.constant 0 : index
    %c37 = arith.constant 37 : index
    %c0_47 = arith.constant 0 : index
    %43 = vector.load %arg1[%c0_45, %c0_46, %c37, %c0_47] : memref<1x1x342x4xf32, #tpu.memory_space<vmem>>, vector<1x1x288x4xf32>
    %44 = vector.shape_cast %43 : vector<1x1x288x4xf32> to vector<288x4xf32>
    %c7 = arith.constant 7 : index
    %c0_48 = arith.constant 0 : index
    %c0_49 = arith.constant 0 : index
    %45 = vector.load %arg2[%c7, %c0_48, %c0_49] : memref<9x4x128xf32, #tpu.memory_space<vmem>>, vector<1x4x128xf32>
    %46 = vector.shape_cast %45 : vector<1x4x128xf32> to vector<4x128xf32>
    %cst_50 = arith.constant dense<0.000000e+00> : vector<288x128xf32>
    %47 = tpu.matmul %44, %46, %cst_50 {dimension_numbers = #tpu.dot_dimension_numbers<[1], [0], [0], [1], [0, 0, 1, 1], [], []>} : vector<288x4xf32>, vector<4x128xf32>, vector<288x128xf32> -> vector<288x128xf32>
    %48 = arith.addf %42, %47 : vector<288x128xf32>
    %c0_51 = arith.constant 0 : index
    %c0_52 = arith.constant 0 : index
    %c38 = arith.constant 38 : index
    %c0_53 = arith.constant 0 : index
    %49 = vector.load %arg1[%c0_51, %c0_52, %c38, %c0_53] : memref<1x1x342x4xf32, #tpu.memory_space<vmem>>, vector<1x1x288x4xf32>
    %50 = vector.shape_cast %49 : vector<1x1x288x4xf32> to vector<288x4xf32>
    %c8 = arith.constant 8 : index
    %c0_54 = arith.constant 0 : index
    %c0_55 = arith.constant 0 : index
    %51 = vector.load %arg2[%c8, %c0_54, %c0_55] : memref<9x4x128xf32, #tpu.memory_space<vmem>>, vector<1x4x128xf32>
    %52 = vector.shape_cast %51 : vector<1x4x128xf32> to vector<4x128xf32>
    %cst_56 = arith.constant dense<0.000000e+00> : vector<288x128xf32>
    %53 = tpu.matmul %50, %52, %cst_56 {dimension_numbers = #tpu.dot_dimension_numbers<[1], [0], [0], [1], [0, 0, 1, 1], [], []>} : vector<288x4xf32>, vector<4x128xf32>, vector<288x128xf32> -> vector<288x128xf32>
    %54 = arith.addf %48, %53 : vector<288x128xf32>
    %c0_57 = arith.constant 0 : index
    %c0_58 = arith.constant 0 : index
    %c0_59 = arith.constant 0 : index
    %55 = vector.load %arg4[%c0_57, %c0_58, %c0_59] : memref<1x288x128xf32, #tpu.memory_space<vmem>>, vector<1x288x128xf32>
    %56 = vector.shape_cast %55 : vector<1x288x128xf32> to vector<288x128xf32>
    %57 = vector.shape_cast %54 : vector<288x128xf32> to vector<1x288x128xf32>
    tpu.vector_store %arg4[%c0_57, %c0_58, %c0_59], %57 {strides = array<i32>} : memref<1x288x128xf32, #tpu.memory_space<vmem>>, vector<1x288x128xf32>,
    %c0_60 = arith.constant 0 : index
    %c0_61 = arith.constant 0 : index
    %58 = vector.load %arg3[%c0_60, %c0_61] : memref<288x1xf32, #tpu.memory_space<vmem>>, vector<288x1xf32>
    %59 = vector.broadcast %58 : vector<288x1xf32> to vector<288x128xf32>
    %60 = arith.mulf %54, %59 : vector<288x128xf32>
    %cst_62 = arith.constant dense<0.000000e+00> : vector<128xf32>
    %61 = vector.multi_reduction <add>, %60, %cst_62 [0] : vector<288x128xf32> to vector<128xf32>
    %62 = vector.shape_cast %61 : vector<128xf32> to vector<1x128xf32>
    %c0_63 = arith.constant 0 : index
    %c0_64 = arith.constant 0 : index
    %c0_65 = arith.constant 0 : index
    %63 = vector.load %arg5[%c0_63, %c0_64, %c0_65] : memref<1x1x128xf32, #tpu.memory_space<vmem>>, vector<1x1x128xf32>
    %64 = vector.shape_cast %63 : vector<1x1x128xf32> to vector<1x128xf32>
    %65 = vector.shape_cast %62 : vector<1x128xf32> to vector<1x1x128xf32>
    tpu.vector_store %arg5[%c0_63, %c0_64, %c0_65], %65 {strides = array<i32>} : memref<1x1x128xf32, #tpu.memory_space<vmem>>, vector<1x1x128xf32>,
    %66 = arith.mulf %60, %60 : vector<288x128xf32>
    %cst_66 = arith.constant dense<0.000000e+00> : vector<128xf32>
    %67 = vector.multi_reduction <add>, %66, %cst_66 [0] : vector<288x128xf32> to vector<128xf32>
    %68 = vector.shape_cast %67 : vector<128xf32> to vector<1x128xf32>
    %c0_67 = arith.constant 0 : index
    %c0_68 = arith.constant 0 : index
    %c0_69 = arith.constant 0 : index
    %69 = vector.load %arg6[%c0_67, %c0_68, %c0_69] : memref<1x1x128xf32, #tpu.memory_space<vmem>>, vector<1x1x128xf32>
    %70 = vector.shape_cast %69 : vector<1x1x128xf32> to vector<1x128xf32>
    %71 = vector.shape_cast %68 : vector<1x128xf32> to vector<1x1x128xf32>
    tpu.vector_store %arg6[%c0_67, %c0_68, %c0_69], %71 {strides = array<i32>} : memref<1x1x128xf32, #tpu.memory_space<vmem>>, vector<1x1x128xf32>,
    return
  }
  func.func @transform_0(%arg0: i32) -> (i32, i32, i32, i32) {
    %c0_i32 = arith.constant 0 : i32
    %c0_i32_0 = arith.constant 0 : i32
    %c0_i32_1 = arith.constant 0 : i32
    %c0_i32_2 = arith.constant 0 : i32
    return %c0_i32, %arg0, %c0_i32_0, %c0_i32_1 : i32, i32, i32, i32
  }
  func.func @transform_1(%arg0: i32) -> (i32, i32, i32) {
    %c0_i32 = arith.constant 0 : i32
    %c0_i32_0 = arith.constant 0 : i32
    %c0_i32_1 = arith.constant 0 : i32
    %c0_i32_2 = arith.constant 0 : i32
    return %c0_i32, %c0_i32_0, %c0_i32_1 : i32, i32, i32
  }
  func.func @transform_2(%arg0: i32) -> (i32, i32) {
    %c0_i32 = arith.constant 0 : i32
    %c0_i32_0 = arith.constant 0 : i32
    %c0_i32_1 = arith.constant 0 : i32
    return %c0_i32, %c0_i32_0 : i32, i32
  }
  func.func @transform_3(%arg0: i32) -> (i32, i32, i32) {
    %c0_i32 = arith.constant 0 : i32
    %c0_i32_0 = arith.constant 0 : i32
    %c0_i32_1 = arith.constant 0 : i32
    return %arg0, %c0_i32, %c0_i32_0 : i32, i32, i32
  }
  func.func @transform_4(%arg0: i32) -> (i32, i32, i32) {
    %c0_i32 = arith.constant 0 : i32
    %c0_i32_0 = arith.constant 0 : i32
    %c0_i32_1 = arith.constant 0 : i32
    return %arg0, %c0_i32, %c0_i32_0 : i32, i32, i32
  }
  func.func @transform_5(%arg0: i32) -> (i32, i32, i32) {
    %c0_i32 = arith.constant 0 : i32
    %c0_i32_0 = arith.constant 0 : i32
    %c0_i32_1 = arith.constant 0 : i32
    return %arg0, %c0_i32, %c0_i32_0 : i32, i32, i32
  }
}

</mosaic_0001>

<llo_original>
// kernel: tpu_custom_call.1
$region0: #{tpu_custom_call.1}
  #allocation0 [shape = 'u32[]', space=smem, size = 0x4, offset = 0x4, fixed_abs, tag = 'smem constant byte address 0x4 - core index']
  #allocation1 [shape = 'u32[72,128]{1,0:T(1,128)}', space=vmem, size = 0x9000, scoped, tag = 'internal scratch']
  %s0 = inlined_call_operand.vmem [shape: f32[1,2,342,4], index: 0, kind: input, shape index: {}]
  %s1 = inlined_call_operand.vmem [shape: f32[9,4,128], index: 1, kind: input, shape index: {}]
  %s2 = inlined_call_operand.vmem [shape: f32[288,1], index: 2, kind: input, shape index: {}]
  %s3 = inlined_call_operand.hbm [shape: f32[2,288,128], index: 3, kind: output, shape index: {0}]
  %s4 = inlined_call_operand.hbm [shape: f32[2,1,128], index: 4, kind: output, shape index: {1}]
  %s5 = inlined_call_operand.hbm [shape: f32[2,1,128], index: 5, kind: output, shape index: {2}]
  %6 = xla_tuple %s3, %s4, %s5
  %s7 = sld [smem:[#allocation0]]
  $region61: #{tpu_custom_call.1} parent=0
    _
  %s9 = ssub.s32 1, %s7
  %s10 = scalar_select 0, %s9, %s7
  $region1: #{tpu_custom_call.1} parent=0
    #allocation2 [shape = 'u8[294912]{0}', space=vmem, size = 0x48000, scoped, tag = 'output window, operand 0']
    #allocation3 [shape = 's32[2]{0}', space=sflag, size = 0x8, scoped, tag = 'scoped memory for tpu_custom_call.1']
    #allocation4 [shape = 'u8[1024]{0}', space=vmem, size = 0x400, scoped, tag = 'output window, operand 1']
    #allocation5 [shape = 's32[2]{0}', space=sflag, size = 0x8, scoped, tag = 'scoped memory for tpu_custom_call.1']
    #allocation6 [shape = 'u8[1024]{0}', space=vmem, size = 0x400, scoped, tag = 'output window, operand 2']
    %11 = vsyncpa [#allocation3], 0
    %s12 = scalar_lea.sflag [#allocation3], 1
    %13 = vsyncpa %s12, 0
    %14 = vsyncpa [#allocation5], 0
    %s15 = scalar_lea.sflag [#allocation5], 1
    %16 = vsyncpa %s15, 0
    loop: start=0, step=1, limit=4
    $region2: #{tpu_custom_call.1} parent=1 // loop_pre_header
      _
    $region3: #{tpu_custom_call.1} parent=1 // loop_header
      %s18 = sphi 0, %s22
      %p19 = scmp.ge.s32.totalorder %s18, 4
      %s28 = sphi 0, %s30
      %s31 = sphi 0, %s28
      %s32 = sphi 0, %s31
      %s48 = sphi 0, %s32
      %s52 = sphi 0, %s52
      %s54 = sphi 0, %s52
      %s55 = sphi 0, %s54
      %s69 = sphi 0, %s55
      %s73 = sphi 0, %s73
      %s75 = sphi 0, %s73
      %s76 = sphi 0, %s75
      %s90 = sphi 0, %s76
      %s96 = sphi 0, %s98
      %s99 = sphi 0, %s96
      %s100 = sphi 0, %s99
      %s116 = sphi 0, %s100
      %s122 = sphi 0, %s124
      %s125 = sphi 0, %s122
      %s126 = sphi 0, %s125
      %s142 = sphi 0, %s126
      %s148 = sphi 0, %s150
      %s151 = sphi 0, %s148
      %s152 = sphi 0, %s151
      %s168 = sphi 0, %s152
    $region4: #{tpu_custom_call.1} parent=1 // loop_header_branch
      %21 = sbr.rel (%p19) target = $region8
    $region5: #{tpu_custom_call.1} parent=1 // loop_body
      %s23 = ssub.s32 %s18, 1
      %s24 = ssub.s32 %s18, 2
      %s25 = sadd.s32 %s18, 1
      %s26 = ssub.s32 %s18, %s25
      %p27 = scmp.eq.s32.totalorder %s26, 0
      %s29 = sadd.s32 %s28, 1
      %s30 = scalar_select %p27, %s28, %s29
      %p33 = pneg %p27
      %p34 = scmp.eq.s32.totalorder %s18, 1
      %p35 = por %p33, %p34
      %p36 = scmp.ne.s32.totalorder %s28, %s31
      %p37 = scmp.eq.s32.totalorder %s18, 0
      %p38 = por %p36, %p37
      %p39 = scmp.ne.s32.totalorder %s28, %s31
      %p40 = scmp.eq.s32.totalorder %s23, 1
      %p41 = por %p39, %p40
      %p42 = scmp.ne.s32.totalorder %s31, %s32
      %p43 = scmp.eq.s32.totalorder %s23, 0
      %p44 = por %p42, %p43
      %p45 = scmp.ne.s32.totalorder %s31, %s32
      %p46 = scmp.eq.s32.totalorder %s24, 1
      %p47 = por %p45, %p46
      %p49 = scmp.ne.s32.totalorder %s32, %s48
      %p50 = scmp.eq.s32.totalorder %s24, 0
      %p51 = por %p49, %p50
      %s53 = sadd.s32 %s52, 1
      %p56 = scmp.eq.s32.totalorder %s18, 1
      %p57 = scmp.ne.s32.totalorder %s52, %s54
      %p58 = scmp.eq.s32.totalorder %s18, 0
      %p59 = por %p57, %p58
      %p60 = scmp.ne.s32.totalorder %s52, %s54
      %p61 = scmp.eq.s32.totalorder %s23, 1
      %p62 = por %p60, %p61
      %p63 = scmp.ne.s32.totalorder %s54, %s55
      %p64 = scmp.eq.s32.totalorder %s23, 0
      %p65 = por %p63, %p64
      %p66 = scmp.ne.s32.totalorder %s54, %s55
      %p67 = scmp.eq.s32.totalorder %s24, 1
      %p68 = por %p66, %p67
      %p70 = scmp.ne.s32.totalorder %s55, %s69
      %p71 = scmp.eq.s32.totalorder %s24, 0
      %p72 = por %p70, %p71
      %s74 = sadd.s32 %s73, 1
      %p77 = scmp.eq.s32.totalorder %s18, 1
      %p78 = scmp.ne.s32.totalorder %s73, %s75
      %p79 = scmp.eq.s32.totalorder %s18, 0
      %p80 = por %p78, %p79
      %p81 = scmp.ne.s32.totalorder %s73, %s75
      %p82 = scmp.eq.s32.totalorder %s23, 1
      %p83 = por %p81, %p82
      %p84 = scmp.ne.s32.totalorder %s75, %s76
      %p85 = scmp.eq.s32.totalorder %s23, 0
      %p86 = por %p84, %p85
      %p87 = scmp.ne.s32.totalorder %s75, %s76
      %p88 = scmp.eq.s32.totalorder %s24, 1
      %p89 = por %p87, %p88
      %p91 = scmp.ne.s32.totalorder %s76, %s90
      %p92 = scmp.eq.s32.totalorder %s24, 0
      %p93 = por %p91, %p92
      %s94 = ssub.s32 %s18, %s25
      %p95 = scmp.eq.s32.totalorder %s94, 0
      %s97 = sadd.s32 %s96, 1
      %s98 = scalar_select %p95, %s96, %s97
      %p101 = pneg %p95
      %p102 = scmp.eq.s32.totalorder %s18, 1
      %p103 = por %p101, %p102
      %p104 = scmp.ne.s32.totalorder %s96, %s99
      %p105 = scmp.eq.s32.totalorder %s18, 0
      %p106 = por %p104, %p105
      %p107 = scmp.ne.s32.totalorder %s96, %s99
      %p108 = scmp.eq.s32.totalorder %s23, 1
      %p109 = por %p107, %p108
      %p110 = scmp.ne.s32.totalorder %s99, %s100
      %p111 = scmp.eq.s32.totalorder %s23, 0
      %p112 = por %p110, %p111
      %p113 = scmp.ne.s32.totalorder %s99, %s100
      %p114 = scmp.eq.s32.totalorder %s24, 1
      %p115 = por %p113, %p114
      %p117 = scmp.ne.s32.totalorder %s100, %s116
      %p118 = scmp.eq.s32.totalorder %s24, 0
      %p119 = por %p117, %p118
      %s120 = ssub.s32 %s18, %s25
      %p121 = scmp.eq.s32.totalorder %s120, 0
      %s123 = sadd.s32 %s122, 1
      %s124 = scalar_select %p121, %s122, %s123
      %p127 = pneg %p121
      %p128 = scmp.eq.s32.totalorder %s18, 1
      %p129 = por %p127, %p128
      %p130 = scmp.ne.s32.totalorder %s122, %s125
      %p131 = scmp.eq.s32.totalorder %s18, 0
      %p132 = por %p130, %p131
      %p133 = scmp.ne.s32.totalorder %s122, %s125
      %p134 = scmp.eq.s32.totalorder %s23, 1
      %p135 = por %p133, %p134
      %p136 = scmp.ne.s32.totalorder %s125, %s126
      %p137 = scmp.eq.s32.totalorder %s23, 0
      %p138 = por %p136, %p137
      %p139 = scmp.ne.s32.totalorder %s125, %s126
      %p140 = scmp.eq.s32.totalorder %s24, 1
      %p141 = por %p139, %p140
      %p143 = scmp.ne.s32.totalorder %s126, %s142
      %p144 = scmp.eq.s32.totalorder %s24, 0
      %p145 = por %p143, %p144
      %s146 = ssub.s32 %s18, %s25
      %p147 = scmp.eq.s32.totalorder %s146, 0
      %s149 = sadd.s32 %s148, 1
      %s150 = scalar_select %p147, %s148, %s149
      %p153 = pneg %p147
      %p154 = scmp.eq.s32.totalorder %s18, 1
      %p155 = por %p153, %p154
      %p156 = scmp.ne.s32.totalorder %s148, %s151
      %p157 = scmp.eq.s32.totalorder %s18, 0
      %p158 = por %p156, %p157
      %p159 = scmp.ne.s32.totalorder %s148, %s151
      %p160 = scmp.eq.s32.totalorder %s23, 1
      %p161 = por %p159, %p160
      %p162 = scmp.ne.s32.totalorder %s151, %s152
      %p163 = scmp.eq.s32.totalorder %s23, 0
      %p164 = por %p162, %p163
      %p165 = scmp.ne.s32.totalorder %s151, %s152
      %p166 = scmp.eq.s32.totalorder %s24, 1
      %p167 = por %p165, %p166
      %p169 = scmp.ne.s32.totalorder %s152, %s168
      %p170 = scmp.eq.s32.totalorder %s24, 0
      %p171 = por %p169, %p170
      %p172 = scmp.le.s32.totalorder 1, %s18
      %p173 = scmp.lt.s32.totalorder %s18, 3
      %p174 = pnand %p172, %p173
      %p175 = pneg %p174
      // Predicated region
      $region9: #{tpu_custom_call.1} parent=5 // pred_check
        _
      $region10: #{tpu_custom_call.1} parent=5 // pred_check_branch
        %177 = sbr.rel (%p174) target = $region12
      $region11: #{tpu_custom_call.1} parent=5 // pred_region
        %s178 = ssub.s32 %s18, 1
        // Predicated region
        $region13: #{tpu_custom_call.1} parent=11 // pred_check
          %p179 = pneg %p65
        $region14: #{tpu_custom_call.1} parent=11 // pred_check_branch
          %181 = sbr.rel (%p179) target = $region16
        $region15: #{tpu_custom_call.1} parent=11 // pred_region
          _
        $region16: #{tpu_custom_call.1} parent=11 // pred_fallthru
          _
        // Predicated region
        $region17: #{tpu_custom_call.1} parent=11 // pred_check
          %p182 = pneg %p86
        $region18: #{tpu_custom_call.1} parent=11 // pred_check_branch
          %184 = sbr.rel (%p182) target = $region20
        $region19: #{tpu_custom_call.1} parent=11 // pred_region
          _
        $region20: #{tpu_custom_call.1} parent=11 // pred_fallthru
          _
      $region12: #{tpu_custom_call.1} parent=5 // pred_fallthru
        _
      %p185 = scmp.lt.s32.totalorder %s18, 2
      // Predicated region
      $region21: #{tpu_custom_call.1} parent=5 // pred_check
        %p186 = pneg %p185
      $region22: #{tpu_custom_call.1} parent=5 // pred_check_branch
        %188 = sbr.rel (%p186) target = $region24
      $region23: #{tpu_custom_call.1} parent=5 // pred_region
        // Predicated region
        $region25: #{tpu_custom_call.1} parent=23 // pred_check
          %p189 = pneg %p38
        $region26: #{tpu_custom_call.1} parent=23 // pred_check_branch
          %191 = sbr.rel (%p189) target = $region28
        $region27: #{tpu_custom_call.1} parent=23 // pred_region
          %p192 = scmp.lt.s32.totalorder %s18, 1
          %s193 = scalar_select %p192, %s18, 1
          %s194 = smul.addr %s193, 43
          %s195 = smul.addr %s194, 8
          %s196 = scalar_lea.vmem %s0, %s195
        $region28: #{tpu_custom_call.1} parent=23 // pred_fallthru
          _
      $region24: #{tpu_custom_call.1} parent=5 // pred_fallthru
        _
      %p197 = scmp.le.s32.totalorder 1, %s18
      %p198 = scmp.lt.s32.totalorder %s18, 3
      %p199 = pnand %p197, %p198
      %p200 = pneg %p199
      // Predicated region
      $region29: #{tpu_custom_call.1} parent=5 // pred_check
        _
      $region30: #{tpu_custom_call.1} parent=5 // pred_check_branch
        %202 = sbr.rel (%p199) target = $region32
      $region31: #{tpu_custom_call.1} parent=5 // pred_region
        %s203 = ssub.s32 %s18, 1
        %p204 = scmp.lt.s32.totalorder %s23, 1
        %s205 = scalar_select %p204, %s23, 1
        %s206 = smul.addr %s205, 43
        %s207 = smul.addr %s206, 8
        %s208 = scalar_lea.vmem %s0, %s207
        %p209 = pneg %p44
        %p210 = pneg %p41
        %p211 = pneg %p65
        %p212 = pneg %p62
        %p213 = pneg %p86
        %p214 = pneg %p83
        %p215 = pneg %p112
        %p216 = pneg %p109
        %s217 = sand.u32 %s99, 1
        %s218 = scalar_lea.sflag [#allocation3], %s217
        %s219 = sand.u32 %s99, 1
        %s220 = smul.addr %s219, 288
        %s221 = scalar_lea.vmem [#allocation2], %s220
        %p222 = pneg %p138
        %p223 = pneg %p135
        %s224 = sand.u32 %s23, 1
        %s225 = scalar_lea.sflag [#allocation5], %s224
        %s226 = sand.u32 %s125, 1
        %s227 = scalar_lea.vmem [#allocation4], %s226
        %p228 = pneg %p164
        %p229 = pneg %p161
        %s230 = sand.u32 %s23, 1
        %s231 = scalar_lea.sflag [#allocation5], %s230
        %s232 = sand.u32 %s151, 1
        %s233 = scalar_lea.vmem [#allocation6], %s232
        %p234 = scmp.lt.s32.totalorder %s23, 1
        %s235 = scalar_select %p234, %s23, 1
        %s236 = smul.addr %s235, 43
        %s237 = smul.addr %s236, 8
        %s238 = scalar_lea.vmem %s0, %s237
        %v239 = vld [vmem:[%s238] sm:$0xff]
        %v240 = vld [vmem:[%s238 + $0x8] sm:$0xff]
        %v241 = vld [vmem:[%s238 + $0x10] sm:$0xff]
        %v242 = vld [vmem:[%s238 + $0x18] sm:$0xff]
        %v243 = vld [vmem:[%s238 + $0x20] sm:$0xff]
        %v244 = vld [vmem:[%s238 + $0x28] sm:$0xff]
        %v245 = vld [vmem:[%s238 + $0x30] sm:$0xff]
        %v246 = vld [vmem:[%s238 + $0x38] sm:$0xff]
        %v247 = vld [vmem:[%s238 + $0x40] sm:$0xff]
        %v248 = vld [vmem:[%s238 + $0x48] sm:$0xff]
        %v249 = vld [vmem:[%s238 + $0x50] sm:$0xff]
        %v250 = vld [vmem:[%s238 + $0x58] sm:$0xff]
        %v251 = vld [vmem:[%s238 + $0x60] sm:$0xff]
        %v252 = vld [vmem:[%s238 + $0x68] sm:$0xff]
        %v253 = vld [vmem:[%s238 + $0x70] sm:$0xff]
        %v254 = vld [vmem:[%s238 + $0x78] sm:$0xff]
        %v255 = vld [vmem:[%s238 + $0x80] sm:$0xff]
        %v256 = vld [vmem:[%s238 + $0x88] sm:$0xff]
        %v257 = vld [vmem:[%s238 + $0x90] sm:$0xff]
        %v258 = vld [vmem:[%s238 + $0x98] sm:$0xff]
        %v259 = vld [vmem:[%s238 + $0xa0] sm:$0xff]
        %v260 = vld [vmem:[%s238 + $0xa8] sm:$0xff]
        %v261 = vld [vmem:[%s238 + $0xb0] sm:$0xff]
        %v262 = vld [vmem:[%s238 + $0xb8] sm:$0xff]
        %v263 = vld [vmem:[%s238 + $0xc0] sm:$0xff]
        %v264 = vld [vmem:[%s238 + $0xc8] sm:$0xff]
        %v265 = vld [vmem:[%s238 + $0xd0] sm:$0xff]
        %v266 = vld [vmem:[%s238 + $0xd8] sm:$0xff]
        %v267 = vld [vmem:[%s238 + $0xe0] sm:$0xff]
        %v268 = vld [vmem:[%s238 + $0xe8] sm:$0xff]
        %v269 = vld [vmem:[%s238 + $0xf0] sm:$0xff]
        %v270 = vld [vmem:[%s238 + $0xf8] sm:$0xff]
        %v271 = vld [vmem:[%s238 + $0x100] sm:$0xff]
        %v272 = vld [vmem:[%s238 + $0x108] sm:$0xff]
        %v273 = vld [vmem:[%s238 + $0x110] sm:$0xff]
        %v274 = vld [vmem:[%s238 + $0x118] sm:$0xff]
        %v275 = vld [vmem:[%s1] sm:$0xf]
        %v276 = vld [vmem:[%s238 + $0x1] sm:$0xff]
        %v277 = vld [vmem:[%s238 + $0x9] sm:$0xff]
        %v278 = vld [vmem:[%s238 + $0x11] sm:$0xff]
        %v279 = vld [vmem:[%s238 + $0x19] sm:$0xff]
        %v280 = vld [vmem:[%s238 + $0x21] sm:$0xff]
        %v281 = vld [vmem:[%s238 + $0x29] sm:$0xff]
        %v282 = vld [vmem:[%s238 + $0x31] sm:$0xff]
        %v283 = vld [vmem:[%s238 + $0x39] sm:$0xff]
        %v284 = vld [vmem:[%s238 + $0x41] sm:$0xff]
        %v285 = vld [vmem:[%s238 + $0x49] sm:$0xff]
        %v286 = vld [vmem:[%s238 + $0x51] sm:$0xff]
        %v287 = vld [vmem:[%s238 + $0x59] sm:$0xff]
        %v288 = vld [vmem:[%s238 + $0x61] sm:$0xff]
        %v289 = vld [vmem:[%s238 + $0x69] sm:$0xff]
        %v290 = vld [vmem:[%s238 + $0x71] sm:$0xff]
        %v291 = vld [vmem:[%s238 + $0x79] sm:$0xff]
        %v292 = vld [vmem:[%s238 + $0x81] sm:$0xff]
        %v293 = vld [vmem:[%s238 + $0x89] sm:$0xff]
        %v294 = vld [vmem:[%s238 + $0x91] sm:$0xff]
        %v295 = vld [vmem:[%s238 + $0x99] sm:$0xff]
        %v296 = vld [vmem:[%s238 + $0xa1] sm:$0xff]
        %v297 = vld [vmem:[%s238 + $0xa9] sm:$0xff]
        %v298 = vld [vmem:[%s238 + $0xb1] sm:$0xff]
        %v299 = vld [vmem:[%s238 + $0xb9] sm:$0xff]
        %v300 = vld [vmem:[%s238 + $0xc1] sm:$0xff]
        %v301 = vld [vmem:[%s238 + $0xc9] sm:$0xff]
        %v302 = vld [vmem:[%s238 + $0xd1] sm:$0xff]
        %v303 = vld [vmem:[%s238 + $0xd9] sm:$0xff]
        %v304 = vld [vmem:[%s238 + $0xe1] sm:$0xff]
        %v305 = vld [vmem:[%s238 + $0xe9] sm:$0xff]
        %v306 = vld [vmem:[%s238 + $0xf1] sm:$0xff]
        %v307 = vld [vmem:[%s238 + $0xf9] sm:$0xff]
        %v308 = vld [vmem:[%s238 + $0x101] sm:$0xff]
        %v309 = vld [vmem:[%s238 + $0x109] sm:$0xff]
        %v310 = vld [vmem:[%s238 + $0x111] sm:$0xff]
        %v311 = vld [vmem:[%s238 + $0x119] sm:$0xff]
        %s312 = scalar_lea.vmem %s1, 4
        %v313 = vld [vmem:[%s312] sm:$0xf]
        %vm314 = vcmask 31744
        %v316 = vsel %vm314, %v276, 0
        %v319 = vsel %vm314, %v277, 0
        %v322 = vsel %vm314, %v278, 0
        %v325 = vsel %vm314, %v279, 0
        %v328 = vsel %vm314, %v280, 0
        %v331 = vsel %vm314, %v281, 0
        %v334 = vsel %vm314, %v282, 0
        %v337 = vsel %vm314, %v283, 0
        %v340 = vsel %vm314, %v284, 0
        %v343 = vsel %vm314, %v285, 0
        %v346 = vsel %vm314, %v286, 0
        %v349 = vsel %vm314, %v287, 0
        %v352 = vsel %vm314, %v288, 0
        %v355 = vsel %vm314, %v289, 0
        %v358 = vsel %vm314, %v290, 0
        %v361 = vsel %vm314, %v291, 0
        %v364 = vsel %vm314, %v292, 0
        %v367 = vsel %vm314, %v293, 0
        %v370 = vsel %vm314, %v294, 0
        %v373 = vsel %vm314, %v295, 0
        %v376 = vsel %vm314, %v296, 0
        %v379 = vsel %vm314, %v297, 0
        %v382 = vsel %vm314, %v298, 0
        %v385 = vsel %vm314, %v299, 0
        %v388 = vsel %vm314, %v300, 0
        %v391 = vsel %vm314, %v301, 0
        %v394 = vsel %vm314, %v302, 0
        %v397 = vsel %vm314, %v303, 0
        %v400 = vsel %vm314, %v304, 0
        %v403 = vsel %vm314, %v305, 0
        %v406 = vsel %vm314, %v306, 0
        %v409 = vsel %vm314, %v307, 0
        %v412 = vsel %vm314, %v308, 0
        %v415 = vsel %vm314, %v309, 0
        %v418 = vsel %vm314, %v310, 0
        %v421 = vsel %vm314, %v311, 0
        %vm423 = vcmask 1043456
        %v425 = vsel %vm423, %v313, 0
        %427 = vmatpush.msra.mxu0 0.0
        %428 = vmatpush.msra.mxu0 0.0
        %429 = vmatpush.msra.mxu0 0.0
        %430 = vmatpush.msra.mxu0 0.0
        %431 = vmatpush.msra.mxu0 0.0
        %432 = vmatpush.msra.mxu0 0.0
        %433 = vmatpush.msra.mxu0 0.0
        %434 = vmatpush.msra.mxu0 0.0
        %435 = vmatpush.msra.mxu0 0.0
        %436 = vmatpush.msra.mxu0 0.0
        %437 = vmatpush.msra.mxu0 0.0
        %438 = vmatpush.msra.mxu0 0.0
        %439 = vmatpush.msra.mxu0 0.0
        %440 = vmatpush.msra.mxu0 0.0
        %441 = vmatpush.msra.mxu0 0.0
        %442 = vmatpush.msra.mxu0 %v425
        %443 = vmatmul.f32.gmra.mxu0 %v316
        %v444 = vpop.f32.mrf.mxu0
        %v445 = vadd.f32 0.0, %v444
        %446 = vmatmul.f32.gmra.mxu0 %v319
        %v447 = vpop.f32.mrf.mxu0
        %v448 = vadd.f32 0.0, %v447
        %449 = vmatmul.f32.gmra.mxu0 %v322
        %v450 = vpop.f32.mrf.mxu0
        %v451 = vadd.f32 0.0, %v450
        %452 = vmatmul.f32.gmra.mxu0 %v325
        %v453 = vpop.f32.mrf.mxu0
        %v454 = vadd.f32 0.0, %v453
        %455 = vmatmul.f32.gmra.mxu0 %v328
        %v456 = vpop.f32.mrf.mxu0
        %v457 = vadd.f32 0.0, %v456
        %458 = vmatmul.f32.gmra.mxu0 %v331
        %v459 = vpop.f32.mrf.mxu0
        %v460 = vadd.f32 0.0, %v459
        %461 = vmatmul.f32.gmra.mxu0 %v334
        %v462 = vpop.f32.mrf.mxu0
        %v463 = vadd.f32 0.0, %v462
        %464 = vmatmul.f32.gmra.mxu0 %v337
        %v465 = vpop.f32.mrf.mxu0
        %v466 = vadd.f32 0.0, %v465
        %467 = vmatmul.f32.gmra.mxu0 %v340
        %v468 = vpop.f32.mrf.mxu0
        %v469 = vadd.f32 0.0, %v468
        %470 = vmatmul.f32.gmra.mxu0 %v343
        %v471 = vpop.f32.mrf.mxu0
        %v472 = vadd.f32 0.0, %v471
        %473 = vmatmul.f32.gmra.mxu0 %v346
        %v474 = vpop.f32.mrf.mxu0
        %v475 = vadd.f32 0.0, %v474
        %476 = vmatmul.f32.gmra.mxu0 %v349
        %v477 = vpop.f32.mrf.mxu0
        %v478 = vadd.f32 0.0, %v477
        %479 = vmatmul.f32.gmra.mxu0 %v352
        %v480 = vpop.f32.mrf.mxu0
        %v481 = vadd.f32 0.0, %v480
        %482 = vmatmul.f32.gmra.mxu0 %v355
        %v483 = vpop.f32.mrf.mxu0
        %v484 = vadd.f32 0.0, %v483
        %485 = vmatmul.f32.gmra.mxu0 %v358
        %v486 = vpop.f32.mrf.mxu0
        %v487 = vadd.f32 0.0, %v486
        %488 = vmatmul.f32.gmra.mxu0 %v361
        %v489 = vpop.f32.mrf.mxu0
        %v490 = vadd.f32 0.0, %v489
        %491 = vmatmul.f32.gmra.mxu0 %v364
        %v492 = vpop.f32.mrf.mxu0
        %v493 = vadd.f32 0.0, %v492
        %494 = vmatmul.f32.gmra.mxu0 %v367
        %v495 = vpop.f32.mrf.mxu0
        %v496 = vadd.f32 0.0, %v495
        %497 = vmatmul.f32.gmra.mxu0 %v370
        %v498 = vpop.f32.mrf.mxu0
        %v499 = vadd.f32 0.0, %v498
        %500 = vmatmul.f32.gmra.mxu0 %v373
        %v501 = vpop.f32.mrf.mxu0
        %v502 = vadd.f32 0.0, %v501
        %503 = vmatmul.f32.gmra.mxu0 %v376
        %v504 = vpop.f32.mrf.mxu0
        %v505 = vadd.f32 0.0, %v504
        %506 = vmatmul.f32.gmra.mxu0 %v379
        %v507 = vpop.f32.mrf.mxu0
        %v508 = vadd.f32 0.0, %v507
        %509 = vmatmul.f32.gmra.mxu0 %v382
        %v510 = vpop.f32.mrf.mxu0
        %v511 = vadd.f32 0.0, %v510
        %512 = vmatmul.f32.gmra.mxu0 %v385
        %v513 = vpop.f32.mrf.mxu0
        %v514 = vadd.f32 0.0, %v513
        %515 = vmatmul.f32.gmra.mxu0 %v388
        %v516 = vpop.f32.mrf.mxu0
        %v517 = vadd.f32 0.0, %v516
        %518 = vmatmul.f32.gmra.mxu0 %v391
        %v519 = vpop.f32.mrf.mxu0
        %v520 = vadd.f32 0.0, %v519
        %521 = vmatmul.f32.gmra.mxu0 %v394
        %v522 = vpop.f32.mrf.mxu0
        %v523 = vadd.f32 0.0, %v522
        %524 = vmatmul.f32.gmra.mxu0 %v397
        %v525 = vpop.f32.mrf.mxu0
        %v526 = vadd.f32 0.0, %v525
        %527 = vmatmul.f32.gmra.mxu0 %v400
        %v528 = vpop.f32.mrf.mxu0
        %v529 = vadd.f32 0.0, %v528
        %530 = vmatmul.f32.gmra.mxu0 %v403
        %v531 = vpop.f32.mrf.mxu0
        %v532 = vadd.f32 0.0, %v531
        %533 = vmatmul.f32.gmra.mxu0 %v406
        %v534 = vpop.f32.mrf.mxu0
        %v535 = vadd.f32 0.0, %v534
        %536 = vmatmul.f32.gmra.mxu0 %v409
        %v537 = vpop.f32.mrf.mxu0
        %v538 = vadd.f32 0.0, %v537
        %539 = vmatmul.f32.gmra.mxu0 %v412
        %v540 = vpop.f32.mrf.mxu0
        %v541 = vadd.f32 0.0, %v540
        %542 = vmatmul.f32.gmra.mxu0 %v415
        %v543 = vpop.f32.mrf.mxu0
        %v544 = vadd.f32 0.0, %v543
        %545 = vmatmul.f32.gmra.mxu0 %v418
        %v546 = vpop.f32.mrf.mxu0
        %v547 = vadd.f32 0.0, %v546
        %548 = vmatmul.f32.gmra.mxu0 %v421
        %v549 = vpop.f32.mrf.mxu0
        %v550 = vadd.f32 0.0, %v549
        %551 = vdwg.mxu0
        %v553 = vsel %vm314, %v239, 0
        %v556 = vsel %vm314, %v240, 0
        %v559 = vsel %vm314, %v241, 0
        %v562 = vsel %vm314, %v242, 0
        %v565 = vsel %vm314, %v243, 0
        %v568 = vsel %vm314, %v244, 0
        %v571 = vsel %vm314, %v245, 0
        %v574 = vsel %vm314, %v246, 0
        %v577 = vsel %vm314, %v247, 0
        %v580 = vsel %vm314, %v248, 0
        %v583 = vsel %vm314, %v249, 0
        %v586 = vsel %vm314, %v250, 0
        %v589 = vsel %vm314, %v251, 0
        %v592 = vsel %vm314, %v252, 0
        %v595 = vsel %vm314, %v253, 0
        %v598 = vsel %vm314, %v254, 0
        %v601 = vsel %vm314, %v255, 0
        %v604 = vsel %vm314, %v256, 0
        %v607 = vsel %vm314, %v257, 0
        %v610 = vsel %vm314, %v258, 0
        %v613 = vsel %vm314, %v259, 0
        %v616 = vsel %vm314, %v260, 0
        %v619 = vsel %vm314, %v261, 0
        %v622 = vsel %vm314, %v262, 0
        %v625 = vsel %vm314, %v263, 0
        %v628 = vsel %vm314, %v264, 0
        %v631 = vsel %vm314, %v265, 0
        %v634 = vsel %vm314, %v266, 0
        %v637 = vsel %vm314, %v267, 0
        %v640 = vsel %vm314, %v268, 0
        %v643 = vsel %vm314, %v269, 0
        %v646 = vsel %vm314, %v270, 0
        %v649 = vsel %vm314, %v271, 0
        %v652 = vsel %vm314, %v272, 0
        %v655 = vsel %vm314, %v273, 0
        %v658 = vsel %vm314, %v274, 0
        %v661 = vsel %vm423, %v275, 0
        %663 = vmatpush.msra.mxu0 0.0
        %664 = vmatpush.msra.mxu0 0.0
        %665 = vmatpush.msra.mxu0 0.0
        %666 = vmatpush.msra.mxu0 0.0
        %667 = vmatpush.msra.mxu0 0.0
        %668 = vmatpush.msra.mxu0 0.0
        %669 = vmatpush.msra.mxu0 0.0
        %670 = vmatpush.msra.mxu0 0.0
        %671 = vmatpush.msra.mxu0 0.0
        %672 = vmatpush.msra.mxu0 0.0
        %673 = vmatpush.msra.mxu0 0.0
        %674 = vmatpush.msra.mxu0 0.0
        %675 = vmatpush.msra.mxu0 0.0
        %676 = vmatpush.msra.mxu0 0.0
        %677 = vmatpush.msra.mxu0 0.0
        %678 = vmatpush.msra.mxu0 %v661
        %679 = vmatmul.f32.gmra.mxu0 %v553
        %v680 = vpop.f32.mrf.mxu0
        %v681 = vadd.f32 %v445, %v680
        %682 = vmatmul.f32.gmra.mxu0 %v556
        %v683 = vpop.f32.mrf.mxu0
        %v684 = vadd.f32 %v448, %v683
        %685 = vmatmul.f32.gmra.mxu0 %v559
        %v686 = vpop.f32.mrf.mxu0
        %v687 = vadd.f32 %v451, %v686
        %688 = vmatmul.f32.gmra.mxu0 %v562
        %v689 = vpop.f32.mrf.mxu0
        %v690 = vadd.f32 %v454, %v689
        %691 = vmatmul.f32.gmra.mxu0 %v565
        %v692 = vpop.f32.mrf.mxu0
        %v693 = vadd.f32 %v457, %v692
        %694 = vmatmul.f32.gmra.mxu0 %v568
        %v695 = vpop.f32.mrf.mxu0
        %v696 = vadd.f32 %v460, %v695
        %697 = vmatmul.f32.gmra.mxu0 %v571
        %v698 = vpop.f32.mrf.mxu0
        %v699 = vadd.f32 %v463, %v698
        %700 = vmatmul.f32.gmra.mxu0 %v574
        %v701 = vpop.f32.mrf.mxu0
        %v702 = vadd.f32 %v466, %v701
        %703 = vmatmul.f32.gmra.mxu0 %v577
        %v704 = vpop.f32.mrf.mxu0
        %v705 = vadd.f32 %v469, %v704
        %706 = vmatmul.f32.gmra.mxu0 %v580
        %v707 = vpop.f32.mrf.mxu0
        %v708 = vadd.f32 %v472, %v707
        %709 = vmatmul.f32.gmra.mxu0 %v583
        %v710 = vpop.f32.mrf.mxu0
        %v711 = vadd.f32 %v475, %v710
        %712 = vmatmul.f32.gmra.mxu0 %v586
        %v713 = vpop.f32.mrf.mxu0
        %v714 = vadd.f32 %v478, %v713
        %715 = vmatmul.f32.gmra.mxu0 %v589
        %v716 = vpop.f32.mrf.mxu0
        %v717 = vadd.f32 %v481, %v716
        %718 = vmatmul.f32.gmra.mxu0 %v592
        %v719 = vpop.f32.mrf.mxu0
        %v720 = vadd.f32 %v484, %v719
        %721 = vmatmul.f32.gmra.mxu0 %v595
        %v722 = vpop.f32.mrf.mxu0
        %v723 = vadd.f32 %v487, %v722
        %724 = vmatmul.f32.gmra.mxu0 %v598
        %v725 = vpop.f32.mrf.mxu0
        %v726 = vadd.f32 %v490, %v725
        %727 = vmatmul.f32.gmra.mxu0 %v601
        %v728 = vpop.f32.mrf.mxu0
        %v729 = vadd.f32 %v493, %v728
        %730 = vmatmul.f32.gmra.mxu0 %v604
        %v731 = vpop.f32.mrf.mxu0
        %v732 = vadd.f32 %v496, %v731
        %733 = vmatmul.f32.gmra.mxu0 %v607
        %v734 = vpop.f32.mrf.mxu0
        %v735 = vadd.f32 %v499, %v734
        %736 = vmatmul.f32.gmra.mxu0 %v610
        %v737 = vpop.f32.mrf.mxu0
        %v738 = vadd.f32 %v502, %v737
        %739 = vmatmul.f32.gmra.mxu0 %v613
        %v740 = vpop.f32.mrf.mxu0
        %v741 = vadd.f32 %v505, %v740
        %742 = vmatmul.f32.gmra.mxu0 %v616
        %v743 = vpop.f32.mrf.mxu0
        %v744 = vadd.f32 %v508, %v743
        %745 = vmatmul.f32.gmra.mxu0 %v619
        %v746 = vpop.f32.mrf.mxu0
        %v747 = vadd.f32 %v511, %v746
        %748 = vmatmul.f32.gmra.mxu0 %v622
        %v749 = vpop.f32.mrf.mxu0
        %v750 = vadd.f32 %v514, %v749
        %751 = vmatmul.f32.gmra.mxu0 %v625
        %v752 = vpop.f32.mrf.mxu0
        %v753 = vadd.f32 %v517, %v752
        %754 = vmatmul.f32.gmra.mxu0 %v628
        %v755 = vpop.f32.mrf.mxu0
        %v756 = vadd.f32 %v520, %v755
        %757 = vmatmul.f32.gmra.mxu0 %v631
        %v758 = vpop.f32.mrf.mxu0
        %v759 = vadd.f32 %v523, %v758
        %760 = vmatmul.f32.gmra.mxu0 %v634
        %v761 = vpop.f32.mrf.mxu0
        %v762 = vadd.f32 %v526, %v761
        %763 = vmatmul.f32.gmra.mxu0 %v637
        %v764 = vpop.f32.mrf.mxu0
        %v765 = vadd.f32 %v529, %v764
        %766 = vmatmul.f32.gmra.mxu0 %v640
        %v767 = vpop.f32.mrf.mxu0
        %v768 = vadd.f32 %v532, %v767
        %769 = vmatmul.f32.gmra.mxu0 %v643
        %v770 = vpop.f32.mrf.mxu0
        %v771 = vadd.f32 %v535, %v770
        %772 = vmatmul.f32.gmra.mxu0 %v646
        %v773 = vpop.f32.mrf.mxu0
        %v774 = vadd.f32 %v538, %v773
        %775 = vmatmul.f32.gmra.mxu0 %v649
        %v776 = vpop.f32.mrf.mxu0
        %v777 = vadd.f32 %v541, %v776
        %778 = vmatmul.f32.gmra.mxu0 %v652
        %v779 = vpop.f32.mrf.mxu0
        %v780 = vadd.f32 %v544, %v779
        %781 = vmatmul.f32.gmra.mxu0 %v655
        %v782 = vpop.f32.mrf.mxu0
        %v783 = vadd.f32 %v547, %v782
        %784 = vmatmul.f32.gmra.mxu0 %v658
        %v785 = vpop.f32.mrf.mxu0
        %v786 = vadd.f32 %v550, %v785
        %787 = vdwg.mxu0
        %v788 = vld [vmem:[%s238 + $0x2] sm:$0xff]
        %v789 = vld [vmem:[%s238 + $0xa] sm:$0xff]
        %v790 = vld [vmem:[%s238 + $0x12] sm:$0xff]
        %v791 = vld [vmem:[%s238 + $0x1a] sm:$0xff]
        %v792 = vld [vmem:[%s238 + $0x22] sm:$0xff]
        %v793 = vld [vmem:[%s238 + $0x2a] sm:$0xff]
        %v794 = vld [vmem:[%s238 + $0x32] sm:$0xff]
        %v795 = vld [vmem:[%s238 + $0x3a] sm:$0xff]
        %v796 = vld [vmem:[%s238 + $0x42] sm:$0xff]
        %v797 = vld [vmem:[%s238 + $0x4a] sm:$0xff]
        %v798 = vld [vmem:[%s238 + $0x52] sm:$0xff]
        %v799 = vld [vmem:[%s238 + $0x5a] sm:$0xff]
        %v800 = vld [vmem:[%s238 + $0x62] sm:$0xff]
        %v801 = vld [vmem:[%s238 + $0x6a] sm:$0xff]
        %v802 = vld [vmem:[%s238 + $0x72] sm:$0xff]
        %v803 = vld [vmem:[%s238 + $0x7a] sm:$0xff]
        %v804 = vld [vmem:[%s238 + $0x82] sm:$0xff]
        %v805 = vld [vmem:[%s238 + $0x8a] sm:$0xff]
        %v806 = vld [vmem:[%s238 + $0x92] sm:$0xff]
        %v807 = vld [vmem:[%s238 + $0x9a] sm:$0xff]
        %v808 = vld [vmem:[%s238 + $0xa2] sm:$0xff]
        %v809 = vld [vmem:[%s238 + $0xaa] sm:$0xff]
        %v810 = vld [vmem:[%s238 + $0xb2] sm:$0xff]
        %v811 = vld [vmem:[%s238 + $0xba] sm:$0xff]
        %v812 = vld [vmem:[%s238 + $0xc2] sm:$0xff]
        %v813 = vld [vmem:[%s238 + $0xca] sm:$0xff]
        %v814 = vld [vmem:[%s238 + $0xd2] sm:$0xff]
        %v815 = vld [vmem:[%s238 + $0xda] sm:$0xff]
        %v816 = vld [vmem:[%s238 + $0xe2] sm:$0xff]
        %v817 = vld [vmem:[%s238 + $0xea] sm:$0xff]
        %v818 = vld [vmem:[%s238 + $0xf2] sm:$0xff]
        %v819 = vld [vmem:[%s238 + $0xfa] sm:$0xff]
        %v820 = vld [vmem:[%s238 + $0x102] sm:$0xff]
        %v821 = vld [vmem:[%s238 + $0x10a] sm:$0xff]
        %v822 = vld [vmem:[%s238 + $0x112] sm:$0xff]
        %v823 = vld [vmem:[%s238 + $0x11a] sm:$0xff]
        %s824 = scalar_lea.vmem %s1, 8
        %v825 = vld [vmem:[%s824] sm:$0xf]
        %v827 = vsel %vm314, %v788, 0
        %v830 = vsel %vm314, %v789, 0
        %v833 = vsel %vm314, %v790, 0
        %v836 = vsel %vm314, %v791, 0
        %v839 = vsel %vm314, %v792, 0
        %v842 = vsel %vm314, %v793, 0
        %v845 = vsel %vm314, %v794, 0
        %v848 = vsel %vm314, %v795, 0
        %v851 = vsel %vm314, %v796, 0
        %v854 = vsel %vm314, %v797, 0
        %v857 = vsel %vm314, %v798, 0
        %v860 = vsel %vm314, %v799, 0
        %v863 = vsel %vm314, %v800, 0
        %v866 = vsel %vm314, %v801, 0
        %v869 = vsel %vm314, %v802, 0
        %v872 = vsel %vm314, %v803, 0
        %v875 = vsel %vm314, %v804, 0
        %v878 = vsel %vm314, %v805, 0
        %v881 = vsel %vm314, %v806, 0
        %v884 = vsel %vm314, %v807, 0
        %v887 = vsel %vm314, %v808, 0
        %v890 = vsel %vm314, %v809, 0
        %v893 = vsel %vm314, %v810, 0
        %v896 = vsel %vm314, %v811, 0
        %v899 = vsel %vm314, %v812, 0
        %v902 = vsel %vm314, %v813, 0
        %v905 = vsel %vm314, %v814, 0
        %v908 = vsel %vm314, %v815, 0
        %v911 = vsel %vm314, %v816, 0
        %v914 = vsel %vm314, %v817, 0
        %v917 = vsel %vm314, %v818, 0
        %v920 = vsel %vm314, %v819, 0
        %v923 = vsel %vm314, %v820, 0
        %v926 = vsel %vm314, %v821, 0
        %v929 = vsel %vm314, %v822, 0
        %v932 = vsel %vm314, %v823, 0
        %v935 = vsel %vm423, %v825, 0
        %937 = vmatpush.msra.mxu0 0.0
        %938 = vmatpush.msra.mxu0 0.0
        %939 = vmatpush.msra.mxu0 0.0
        %940 = vmatpush.msra.mxu0 0.0
        %941 = vmatpush.msra.mxu0 0.0
        %942 = vmatpush.msra.mxu0 0.0
        %943 = vmatpush.msra.mxu0 0.0
        %944 = vmatpush.msra.mxu0 0.0
        %945 = vmatpush.msra.mxu0 0.0
        %946 = vmatpush.msra.mxu0 0.0
        %947 = vmatpush.msra.mxu0 0.0
        %948 = vmatpush.msra.mxu0 0.0
        %949 = vmatpush.msra.mxu0 0.0
        %950 = vmatpush.msra.mxu0 0.0
        %951 = vmatpush.msra.mxu0 0.0
        %952 = vmatpush.msra.mxu0 %v935
        %953 = vmatmul.f32.gmra.mxu0 %v827
        %v954 = vpop.f32.mrf.mxu0
        %v955 = vadd.f32 0.0, %v954
        %956 = vmatmul.f32.gmra.mxu0 %v830
        %v957 = vpop.f32.mrf.mxu0
        %v958 = vadd.f32 0.0, %v957
        %959 = vmatmul.f32.gmra.mxu0 %v833
        %v960 = vpop.f32.mrf.mxu0
        %v961 = vadd.f32 0.0, %v960
        %962 = vmatmul.f32.gmra.mxu0 %v836
        %v963 = vpop.f32.mrf.mxu0
        %v964 = vadd.f32 0.0, %v963
        %965 = vmatmul.f32.gmra.mxu0 %v839
        %v966 = vpop.f32.mrf.mxu0
        %v967 = vadd.f32 0.0, %v966
        %968 = vmatmul.f32.gmra.mxu0 %v842
        %v969 = vpop.f32.mrf.mxu0
        %v970 = vadd.f32 0.0, %v969
        %971 = vmatmul.f32.gmra.mxu0 %v845
        %v972 = vpop.f32.mrf.mxu0
        %v973 = vadd.f32 0.0, %v972
        %974 = vmatmul.f32.gmra.mxu0 %v848
        %v975 = vpop.f32.mrf.mxu0
        %v976 = vadd.f32 0.0, %v975
        %977 = vmatmul.f32.gmra.mxu0 %v851
        %v978 = vpop.f32.mrf.mxu0
        %v979 = vadd.f32 0.0, %v978
        %980 = vmatmul.f32.gmra.mxu0 %v854
        %v981 = vpop.f32.mrf.mxu0
        %v982 = vadd.f32 0.0, %v981
        %983 = vmatmul.f32.gmra.mxu0 %v857
        %v984 = vpop.f32.mrf.mxu0
        %v985 = vadd.f32 0.0, %v984
        %986 = vmatmul.f32.gmra.mxu0 %v860
        %v987 = vpop.f32.mrf.mxu0
        %v988 = vadd.f32 0.0, %v987
        %989 = vmatmul.f32.gmra.mxu0 %v863
        %v990 = vpop.f32.mrf.mxu0
        %v991 = vadd.f32 0.0, %v990
        %992 = vmatmul.f32.gmra.mxu0 %v866
        %v993 = vpop.f32.mrf.mxu0
        %v994 = vadd.f32 0.0, %v993
        %995 = vmatmul.f32.gmra.mxu0 %v869
        %v996 = vpop.f32.mrf.mxu0
        %v997 = vadd.f32 0.0, %v996
        %998 = vmatmul.f32.gmra.mxu0 %v872
        %v999 = vpop.f32.mrf.mxu0
        %v1000 = vadd.f32 0.0, %v999
        %1001 = vmatmul.f32.gmra.mxu0 %v875
        %v1002 = vpop.f32.mrf.mxu0
        %v1003 = vadd.f32 0.0, %v1002
        %1004 = vmatmul.f32.gmra.mxu0 %v878
        %v1005 = vpop.f32.mrf.mxu0
        %v1006 = vadd.f32 0.0, %v1005
        %1007 = vmatmul.f32.gmra.mxu0 %v881
        %v1008 = vpop.f32.mrf.mxu0
        %v1009 = vadd.f32 0.0, %v1008
        %1010 = vmatmul.f32.gmra.mxu0 %v884
        %v1011 = vpop.f32.mrf.mxu0
        %v1012 = vadd.f32 0.0, %v1011
        %1013 = vmatmul.f32.gmra.mxu0 %v887
        %v1014 = vpop.f32.mrf.mxu0
        %v1015 = vadd.f32 0.0, %v1014
        %1016 = vmatmul.f32.gmra.mxu0 %v890
        %v1017 = vpop.f32.mrf.mxu0
        %v1018 = vadd.f32 0.0, %v1017
        %1019 = vmatmul.f32.gmra.mxu0 %v893
        %v1020 = vpop.f32.mrf.mxu0
        %v1021 = vadd.f32 0.0, %v1020
        %1022 = vmatmul.f32.gmra.mxu0 %v896
        %v1023 = vpop.f32.mrf.mxu0
        %v1024 = vadd.f32 0.0, %v1023
        %1025 = vmatmul.f32.gmra.mxu0 %v899
        %v1026 = vpop.f32.mrf.mxu0
        %v1027 = vadd.f32 0.0, %v1026
        %1028 = vmatmul.f32.gmra.mxu0 %v902
        %v1029 = vpop.f32.mrf.mxu0
        %v1030 = vadd.f32 0.0, %v1029
        %1031 = vmatmul.f32.gmra.mxu0 %v905
        %v1032 = vpop.f32.mrf.mxu0
        %v1033 = vadd.f32 0.0, %v1032
        %1034 = vmatmul.f32.gmra.mxu0 %v908
        %v1035 = vpop.f32.mrf.mxu0
        %v1036 = vadd.f32 0.0, %v1035
        %1037 = vmatmul.f32.gmra.mxu0 %v911
        %v1038 = vpop.f32.mrf.mxu0
        %v1039 = vadd.f32 0.0, %v1038
        %1040 = vmatmul.f32.gmra.mxu0 %v914
        %v1041 = vpop.f32.mrf.mxu0
        %v1042 = vadd.f32 0.0, %v1041
        %1043 = vmatmul.f32.gmra.mxu0 %v917
        %v1044 = vpop.f32.mrf.mxu0
        %v1045 = vadd.f32 0.0, %v1044
        %1046 = vmatmul.f32.gmra.mxu0 %v920
        %v1047 = vpop.f32.mrf.mxu0
        %v1048 = vadd.f32 0.0, %v1047
        %1049 = vmatmul.f32.gmra.mxu0 %v923
        %v1050 = vpop.f32.mrf.mxu0
        %v1051 = vadd.f32 0.0, %v1050
        %1052 = vmatmul.f32.gmra.mxu0 %v926
        %v1053 = vpop.f32.mrf.mxu0
        %v1054 = vadd.f32 0.0, %v1053
        %1055 = vmatmul.f32.gmra.mxu0 %v929
        %v1056 = vpop.f32.mrf.mxu0
        %v1057 = vadd.f32 0.0, %v1056
        %1058 = vmatmul.f32.gmra.mxu0 %v932
        %v1059 = vpop.f32.mrf.mxu0
        %v1060 = vadd.f32 0.0, %v1059
        %1061 = vdwg.mxu0
        %v1062 = vadd.f32 %v681, %v955
        %v1063 = vadd.f32 %v684, %v958
        %v1064 = vadd.f32 %v687, %v961
        %v1065 = vadd.f32 %v690, %v964
        %v1066 = vadd.f32 %v693, %v967
        %v1067 = vadd.f32 %v696, %v970
        %v1068 = vadd.f32 %v699, %v973
        %v1069 = vadd.f32 %v702, %v976
        %v1070 = vadd.f32 %v705, %v979
        %v1071 = vadd.f32 %v708, %v982
        %v1072 = vadd.f32 %v711, %v985
        %v1073 = vadd.f32 %v714, %v988
        %v1074 = vadd.f32 %v717, %v991
        %v1075 = vadd.f32 %v720, %v994
        %v1076 = vadd.f32 %v723, %v997
        %v1077 = vadd.f32 %v726, %v1000
        %v1078 = vadd.f32 %v729, %v1003
        %v1079 = vadd.f32 %v732, %v1006
        %v1080 = vadd.f32 %v735, %v1009
        %v1081 = vadd.f32 %v738, %v1012
        %v1082 = vadd.f32 %v741, %v1015
        %v1083 = vadd.f32 %v744, %v1018
        %v1084 = vadd.f32 %v747, %v1021
        %v1085 = vadd.f32 %v750, %v1024
        %v1086 = vadd.f32 %v753, %v1027
        %v1087 = vadd.f32 %v756, %v1030
        %v1088 = vadd.f32 %v759, %v1033
        %v1089 = vadd.f32 %v762, %v1036
        %v1090 = vadd.f32 %v765, %v1039
        %v1091 = vadd.f32 %v768, %v1042
        %v1092 = vadd.f32 %v771, %v1045
        %v1093 = vadd.f32 %v774, %v1048
        %v1094 = vadd.f32 %v777, %v1051
        %v1095 = vadd.f32 %v780, %v1054
        %v1096 = vadd.f32 %v783, %v1057
        %v1097 = vadd.f32 %v786, %v1060
        %v1098 = vld [vmem:[%s238 + $0x12] sm:$0xff]
        %v1099 = vld [vmem:[%s238 + $0x1a] sm:$0xff]
        %v1100 = vld [vmem:[%s238 + $0x22] sm:$0xff]
        %v1101 = vld [vmem:[%s238 + $0x2a] sm:$0xff]
        %v1102 = vld [vmem:[%s238 + $0x32] sm:$0xff]
        %v1103 = vld [vmem:[%s238 + $0x3a] sm:$0xff]
        %v1104 = vld [vmem:[%s238 + $0x42] sm:$0xff]
        %v1105 = vld [vmem:[%s238 + $0x4a] sm:$0xff]
        %v1106 = vld [vmem:[%s238 + $0x52] sm:$0xff]
        %v1107 = vld [vmem:[%s238 + $0x5a] sm:$0xff]
        %v1108 = vld [vmem:[%s238 + $0x62] sm:$0xff]
        %v1109 = vld [vmem:[%s238 + $0x6a] sm:$0xff]
        %v1110 = vld [vmem:[%s238 + $0x72] sm:$0xff]
        %v1111 = vld [vmem:[%s238 + $0x7a] sm:$0xff]
        %v1112 = vld [vmem:[%s238 + $0x82] sm:$0xff]
        %v1113 = vld [vmem:[%s238 + $0x8a] sm:$0xff]
        %v1114 = vld [vmem:[%s238 + $0x92] sm:$0xff]
        %v1115 = vld [vmem:[%s238 + $0x9a] sm:$0xff]
        %v1116 = vld [vmem:[%s238 + $0xa2] sm:$0xff]
        %v1117 = vld [vmem:[%s238 + $0xaa] sm:$0xff]
        %v1118 = vld [vmem:[%s238 + $0xb2] sm:$0xff]
        %v1119 = vld [vmem:[%s238 + $0xba] sm:$0xff]
        %v1120 = vld [vmem:[%s238 + $0xc2] sm:$0xff]
        %v1121 = vld [vmem:[%s238 + $0xca] sm:$0xff]
        %v1122 = vld [vmem:[%s238 + $0xd2] sm:$0xff]
        %v1123 = vld [vmem:[%s238 + $0xda] sm:$0xff]
        %v1124 = vld [vmem:[%s238 + $0xe2] sm:$0xff]
        %v1125 = vld [vmem:[%s238 + $0xea] sm:$0xff]
        %v1126 = vld [vmem:[%s238 + $0xf2] sm:$0xff]
        %v1127 = vld [vmem:[%s238 + $0xfa] sm:$0xff]
        %v1128 = vld [vmem:[%s238 + $0x102] sm:$0xff]
        %v1129 = vld [vmem:[%s238 + $0x10a] sm:$0xff]
        %v1130 = vld [vmem:[%s238 + $0x112] sm:$0xff]
        %v1131 = vld [vmem:[%s238 + $0x11a] sm:$0xff]
        %v1132 = vld [vmem:[%s238 + $0x122] sm:$0xff]
        %v1133 = vld [vmem:[%s238 + $0x12a] sm:$0xff]
        %s1134 = scalar_lea.vmem %s1, 12
        %v1135 = vld [vmem:[%s1134] sm:$0xf]
        %v1137 = vsel %vm314, %v1098, 0
        %v1140 = vsel %vm314, %v1099, 0
        %v1143 = vsel %vm314, %v1100, 0
        %v1146 = vsel %vm314, %v1101, 0
        %v1149 = vsel %vm314, %v1102, 0
        %v1152 = vsel %vm314, %v1103, 0
        %v1155 = vsel %vm314, %v1104, 0
        %v1158 = vsel %vm314, %v1105, 0
        %v1161 = vsel %vm314, %v1106, 0
        %v1164 = vsel %vm314, %v1107, 0
        %v1167 = vsel %vm314, %v1108, 0
        %v1170 = vsel %vm314, %v1109, 0
        %v1173 = vsel %vm314, %v1110, 0
        %v1176 = vsel %vm314, %v1111, 0
        %v1179 = vsel %vm314, %v1112, 0
        %v1182 = vsel %vm314, %v1113, 0
        %v1185 = vsel %vm314, %v1114, 0
        %v1188 = vsel %vm314, %v1115, 0
        %v1191 = vsel %vm314, %v1116, 0
        %v1194 = vsel %vm314, %v1117, 0
        %v1197 = vsel %vm314, %v1118, 0
        %v1200 = vsel %vm314, %v1119, 0
        %v1203 = vsel %vm314, %v1120, 0
        %v1206 = vsel %vm314, %v1121, 0
        %v1209 = vsel %vm314, %v1122, 0
        %v1212 = vsel %vm314, %v1123, 0
        %v1215 = vsel %vm314, %v1124, 0
        %v1218 = vsel %vm314, %v1125, 0
        %v1221 = vsel %vm314, %v1126, 0
        %v1224 = vsel %vm314, %v1127, 0
        %v1227 = vsel %vm314, %v1128, 0
        %v1230 = vsel %vm314, %v1129, 0
        %v1233 = vsel %vm314, %v1130, 0
        %v1236 = vsel %vm314, %v1131, 0
        %v1239 = vsel %vm314, %v1132, 0
        %v1242 = vsel %vm314, %v1133, 0
        %v1245 = vsel %vm423, %v1135, 0
        %1247 = vmatpush.msra.mxu0 0.0
        %1248 = vmatpush.msra.mxu0 0.0
        %1249 = vmatpush.msra.mxu0 0.0
        %1250 = vmatpush.msra.mxu0 0.0
        %1251 = vmatpush.msra.mxu0 0.0
        %1252 = vmatpush.msra.mxu0 0.0
        %1253 = vmatpush.msra.mxu0 0.0
        %1254 = vmatpush.msra.mxu0 0.0
        %1255 = vmatpush.msra.mxu0 0.0
        %1256 = vmatpush.msra.mxu0 0.0
        %1257 = vmatpush.msra.mxu0 0.0
        %1258 = vmatpush.msra.mxu0 0.0
        %1259 = vmatpush.msra.mxu0 0.0
        %1260 = vmatpush.msra.mxu0 0.0
        %1261 = vmatpush.msra.mxu0 0.0
        %1262 = vmatpush.msra.mxu0 %v1245
        %1263 = vmatmul.f32.gmra.mxu0 %v1137
        %v1264 = vpop.f32.mrf.mxu0
        %v1265 = vadd.f32 0.0, %v1264
        %1266 = vmatmul.f32.gmra.mxu0 %v1140
        %v1267 = vpop.f32.mrf.mxu0
        %v1268 = vadd.f32 0.0, %v1267
        %1269 = vmatmul.f32.gmra.mxu0 %v1143
        %v1270 = vpop.f32.mrf.mxu0
        %v1271 = vadd.f32 0.0, %v1270
        %1272 = vmatmul.f32.gmra.mxu0 %v1146
        %v1273 = vpop.f32.mrf.mxu0
        %v1274 = vadd.f32 0.0, %v1273
        %1275 = vmatmul.f32.gmra.mxu0 %v1149
        %v1276 = vpop.f32.mrf.mxu0
        %v1277 = vadd.f32 0.0, %v1276
        %1278 = vmatmul.f32.gmra.mxu0 %v1152
        %v1279 = vpop.f32.mrf.mxu0
        %v1280 = vadd.f32 0.0, %v1279
        %1281 = vmatmul.f32.gmra.mxu0 %v1155
        %v1282 = vpop.f32.mrf.mxu0
        %v1283 = vadd.f32 0.0, %v1282
        %1284 = vmatmul.f32.gmra.mxu0 %v1158
        %v1285 = vpop.f32.mrf.mxu0
        %v1286 = vadd.f32 0.0, %v1285
        %1287 = vmatmul.f32.gmra.mxu0 %v1161
        %v1288 = vpop.f32.mrf.mxu0
        %v1289 = vadd.f32 0.0, %v1288
        %1290 = vmatmul.f32.gmra.mxu0 %v1164
        %v1291 = vpop.f32.mrf.mxu0
        %v1292 = vadd.f32 0.0, %v1291
        %1293 = vmatmul.f32.gmra.mxu0 %v1167
        %v1294 = vpop.f32.mrf.mxu0
        %v1295 = vadd.f32 0.0, %v1294
        %1296 = vmatmul.f32.gmra.mxu0 %v1170
        %v1297 = vpop.f32.mrf.mxu0
        %v1298 = vadd.f32 0.0, %v1297
        %1299 = vmatmul.f32.gmra.mxu0 %v1173
        %v1300 = vpop.f32.mrf.mxu0
        %v1301 = vadd.f32 0.0, %v1300
        %1302 = vmatmul.f32.gmra.mxu0 %v1176
        %v1303 = vpop.f32.mrf.mxu0
        %v1304 = vadd.f32 0.0, %v1303
        %1305 = vmatmul.f32.gmra.mxu0 %v1179
        %v1306 = vpop.f32.mrf.mxu0
        %v1307 = vadd.f32 0.0, %v1306
        %1308 = vmatmul.f32.gmra.mxu0 %v1182
        %v1309 = vpop.f32.mrf.mxu0
        %v1310 = vadd.f32 0.0, %v1309
        %1311 = vmatmul.f32.gmra.mxu0 %v1185
        %v1312 = vpop.f32.mrf.mxu0
        %v1313 = vadd.f32 0.0, %v1312
        %1314 = vmatmul.f32.gmra.mxu0 %v1188
        %v1315 = vpop.f32.mrf.mxu0
        %v1316 = vadd.f32 0.0, %v1315
        %1317 = vmatmul.f32.gmra.mxu0 %v1191
        %v1318 = vpop.f32.mrf.mxu0
        %v1319 = vadd.f32 0.0, %v1318
        %1320 = vmatmul.f32.gmra.mxu0 %v1194
        %v1321 = vpop.f32.mrf.mxu0
        %v1322 = vadd.f32 0.0, %v1321
        %1323 = vmatmul.f32.gmra.mxu0 %v1197
        %v1324 = vpop.f32.mrf.mxu0
        %v1325 = vadd.f32 0.0, %v1324
        %1326 = vmatmul.f32.gmra.mxu0 %v1200
        %v1327 = vpop.f32.mrf.mxu0
        %v1328 = vadd.f32 0.0, %v1327
        %1329 = vmatmul.f32.gmra.mxu0 %v1203
        %v1330 = vpop.f32.mrf.mxu0
        %v1331 = vadd.f32 0.0, %v1330
        %1332 = vmatmul.f32.gmra.mxu0 %v1206
        %v1333 = vpop.f32.mrf.mxu0
        %v1334 = vadd.f32 0.0, %v1333
        %1335 = vmatmul.f32.gmra.mxu0 %v1209
        %v1336 = vpop.f32.mrf.mxu0
        %v1337 = vadd.f32 0.0, %v1336
        %1338 = vmatmul.f32.gmra.mxu0 %v1212
        %v1339 = vpop.f32.mrf.mxu0
        %v1340 = vadd.f32 0.0, %v1339
        %1341 = vmatmul.f32.gmra.mxu0 %v1215
        %v1342 = vpop.f32.mrf.mxu0
        %v1343 = vadd.f32 0.0, %v1342
        %1344 = vmatmul.f32.gmra.mxu0 %v1218
        %v1345 = vpop.f32.mrf.mxu0
        %v1346 = vadd.f32 0.0, %v1345
        %1347 = vmatmul.f32.gmra.mxu0 %v1221
        %v1348 = vpop.f32.mrf.mxu0
        %v1349 = vadd.f32 0.0, %v1348
        %1350 = vmatmul.f32.gmra.mxu0 %v1224
        %v1351 = vpop.f32.mrf.mxu0
        %v1352 = vadd.f32 0.0, %v1351
        %1353 = vmatmul.f32.gmra.mxu0 %v1227
        %v1354 = vpop.f32.mrf.mxu0
        %v1355 = vadd.f32 0.0, %v1354
        %1356 = vmatmul.f32.gmra.mxu0 %v1230
        %v1357 = vpop.f32.mrf.mxu0
        %v1358 = vadd.f32 0.0, %v1357
        %1359 = vmatmul.f32.gmra.mxu0 %v1233
        %v1360 = vpop.f32.mrf.mxu0
        %v1361 = vadd.f32 0.0, %v1360
        %1362 = vmatmul.f32.gmra.mxu0 %v1236
        %v1363 = vpop.f32.mrf.mxu0
        %v1364 = vadd.f32 0.0, %v1363
        %1365 = vmatmul.f32.gmra.mxu0 %v1239
        %v1366 = vpop.f32.mrf.mxu0
        %v1367 = vadd.f32 0.0, %v1366
        %1368 = vmatmul.f32.gmra.mxu0 %v1242
        %v1369 = vpop.f32.mrf.mxu0
        %v1370 = vadd.f32 0.0, %v1369
        %1371 = vdwg.mxu0
        %v1372 = vadd.f32 %v1062, %v1265
        %v1373 = vadd.f32 %v1063, %v1268
        %v1374 = vadd.f32 %v1064, %v1271
        %v1375 = vadd.f32 %v1065, %v1274
        %v1376 = vadd.f32 %v1066, %v1277
        %v1377 = vadd.f32 %v1067, %v1280
        %v1378 = vadd.f32 %v1068, %v1283
        %v1379 = vadd.f32 %v1069, %v1286
        %v1380 = vadd.f32 %v1070, %v1289
        %v1381 = vadd.f32 %v1071, %v1292
        %v1382 = vadd.f32 %v1072, %v1295
        %v1383 = vadd.f32 %v1073, %v1298
        %v1384 = vadd.f32 %v1074, %v1301
        %v1385 = vadd.f32 %v1075, %v1304
        %v1386 = vadd.f32 %v1076, %v1307
        %v1387 = vadd.f32 %v1077, %v1310
        %v1388 = vadd.f32 %v1078, %v1313
        %v1389 = vadd.f32 %v1079, %v1316
        %v1390 = vadd.f32 %v1080, %v1319
        %v1391 = vadd.f32 %v1081, %v1322
        %v1392 = vadd.f32 %v1082, %v1325
        %v1393 = vadd.f32 %v1083, %v1328
        %v1394 = vadd.f32 %v1084, %v1331
        %v1395 = vadd.f32 %v1085, %v1334
        %v1396 = vadd.f32 %v1086, %v1337
        %v1397 = vadd.f32 %v1087, %v1340
        %v1398 = vadd.f32 %v1088, %v1343
        %v1399 = vadd.f32 %v1089, %v1346
        %v1400 = vadd.f32 %v1090, %v1349
        %v1401 = vadd.f32 %v1091, %v1352
        %v1402 = vadd.f32 %v1092, %v1355
        %v1403 = vadd.f32 %v1093, %v1358
        %v1404 = vadd.f32 %v1094, %v1361
        %v1405 = vadd.f32 %v1095, %v1364
        %v1406 = vadd.f32 %v1096, %v1367
        %v1407 = vadd.f32 %v1097, %v1370
        %v1408 = vld [vmem:[%s238 + $0x13] sm:$0xff]
        %v1409 = vld [vmem:[%s238 + $0x1b] sm:$0xff]
        %v1410 = vld [vmem:[%s238 + $0x23] sm:$0xff]
        %v1411 = vld [vmem:[%s238 + $0x2b] sm:$0xff]
        %v1412 = vld [vmem:[%s238 + $0x33] sm:$0xff]
        %v1413 = vld [vmem:[%s238 + $0x3b] sm:$0xff]
        %v1414 = vld [vmem:[%s238 + $0x43] sm:$0xff]
        %v1415 = vld [vmem:[%s238 + $0x4b] sm:$0xff]
        %v1416 = vld [vmem:[%s238 + $0x53] sm:$0xff]
        %v1417 = vld [vmem:[%s238 + $0x5b] sm:$0xff]
        %v1418 = vld [vmem:[%s238 + $0x63] sm:$0xff]
        %v1419 = vld [vmem:[%s238 + $0x6b] sm:$0xff]
        %v1420 = vld [vmem:[%s238 + $0x73] sm:$0xff]
        %v1421 = vld [vmem:[%s238 + $0x7b] sm:$0xff]
        %v1422 = vld [vmem:[%s238 + $0x83] sm:$0xff]
        %v1423 = vld [vmem:[%s238 + $0x8b] sm:$0xff]
        %v1424 = vld [vmem:[%s238 + $0x93] sm:$0xff]
        %v1425 = vld [vmem:[%s238 + $0x9b] sm:$0xff]
        %v1426 = vld [vmem:[%s238 + $0xa3] sm:$0xff]
        %v1427 = vld [vmem:[%s238 + $0xab] sm:$0xff]
        %v1428 = vld [vmem:[%s238 + $0xb3] sm:$0xff]
        %v1429 = vld [vmem:[%s238 + $0xbb] sm:$0xff]
        %v1430 = vld [vmem:[%s238 + $0xc3] sm:$0xff]
        %v1431 = vld [vmem:[%s238 + $0xcb] sm:$0xff]
        %v1432 = vld [vmem:[%s238 + $0xd3] sm:$0xff]
        %v1433 = vld [vmem:[%s238 + $0xdb] sm:$0xff]
        %v1434 = vld [vmem:[%s238 + $0xe3] sm:$0xff]
        %v1435 = vld [vmem:[%s238 + $0xeb] sm:$0xff]
        %v1436 = vld [vmem:[%s238 + $0xf3] sm:$0xff]
        %v1437 = vld [vmem:[%s238 + $0xfb] sm:$0xff]
        %v1438 = vld [vmem:[%s238 + $0x103] sm:$0xff]
        %v1439 = vld [vmem:[%s238 + $0x10b] sm:$0xff]
        %v1440 = vld [vmem:[%s238 + $0x113] sm:$0xff]
        %v1441 = vld [vmem:[%s238 + $0x11b] sm:$0xff]
        %v1442 = vld [vmem:[%s238 + $0x123] sm:$0xff]
        %v1443 = vld [vmem:[%s238 + $0x12b] sm:$0xff]
        %s1444 = scalar_lea.vmem %s1, 16
        %v1445 = vld [vmem:[%s1444] sm:$0xf]
        %v1447 = vsel %vm314, %v1408, 0
        %v1450 = vsel %vm314, %v1409, 0
        %v1453 = vsel %vm314, %v1410, 0
        %v1456 = vsel %vm314, %v1411, 0
        %v1459 = vsel %vm314, %v1412, 0
        %v1462 = vsel %vm314, %v1413, 0
        %v1465 = vsel %vm314, %v1414, 0
        %v1468 = vsel %vm314, %v1415, 0
        %v1471 = vsel %vm314, %v1416, 0
        %v1474 = vsel %vm314, %v1417, 0
        %v1477 = vsel %vm314, %v1418, 0
        %v1480 = vsel %vm314, %v1419, 0
        %v1483 = vsel %vm314, %v1420, 0
        %v1486 = vsel %vm314, %v1421, 0
        %v1489 = vsel %vm314, %v1422, 0
        %v1492 = vsel %vm314, %v1423, 0
        %v1495 = vsel %vm314, %v1424, 0
        %v1498 = vsel %vm314, %v1425, 0
        %v1501 = vsel %vm314, %v1426, 0
        %v1504 = vsel %vm314, %v1427, 0
        %v1507 = vsel %vm314, %v1428, 0
        %v1510 = vsel %vm314, %v1429, 0
        %v1513 = vsel %vm314, %v1430, 0
        %v1516 = vsel %vm314, %v1431, 0
        %v1519 = vsel %vm314, %v1432, 0
        %v1522 = vsel %vm314, %v1433, 0
        %v1525 = vsel %vm314, %v1434, 0
        %v1528 = vsel %vm314, %v1435, 0
        %v1531 = vsel %vm314, %v1436, 0
        %v1534 = vsel %vm314, %v1437, 0
        %v1537 = vsel %vm314, %v1438, 0
        %v1540 = vsel %vm314, %v1439, 0
        %v1543 = vsel %vm314, %v1440, 0
        %v1546 = vsel %vm314, %v1441, 0
        %v1549 = vsel %vm314, %v1442, 0
        %v1552 = vsel %vm314, %v1443, 0
        %v1555 = vsel %vm423, %v1445, 0
        %1557 = vmatpush.msra.mxu0 0.0
        %1558 = vmatpush.msra.mxu0 0.0
        %1559 = vmatpush.msra.mxu0 0.0
        %1560 = vmatpush.msra.mxu0 0.0
        %1561 = vmatpush.msra.mxu0 0.0
        %1562 = vmatpush.msra.mxu0 0.0
        %1563 = vmatpush.msra.mxu0 0.0
        %1564 = vmatpush.msra.mxu0 0.0
        %1565 = vmatpush.msra.mxu0 0.0
        %1566 = vmatpush.msra.mxu0 0.0
        %1567 = vmatpush.msra.mxu0 0.0
        %1568 = vmatpush.msra.mxu0 0.0
        %1569 = vmatpush.msra.mxu0 0.0
        %1570 = vmatpush.msra.mxu0 0.0
        %1571 = vmatpush.msra.mxu0 0.0
        %1572 = vmatpush.msra.mxu0 %v1555
        %1573 = vmatmul.f32.gmra.mxu0 %v1447
        %v1574 = vpop.f32.mrf.mxu0
        %v1575 = vadd.f32 0.0, %v1574
        %1576 = vmatmul.f32.gmra.mxu0 %v1450
        %v1577 = vpop.f32.mrf.mxu0
        %v1578 = vadd.f32 0.0, %v1577
        %1579 = vmatmul.f32.gmra.mxu0 %v1453
        %v1580 = vpop.f32.mrf.mxu0
        %v1581 = vadd.f32 0.0, %v1580
        %1582 = vmatmul.f32.gmra.mxu0 %v1456
        %v1583 = vpop.f32.mrf.mxu0
        %v1584 = vadd.f32 0.0, %v1583
        %1585 = vmatmul.f32.gmra.mxu0 %v1459
        %v1586 = vpop.f32.mrf.mxu0
        %v1587 = vadd.f32 0.0, %v1586
        %1588 = vmatmul.f32.gmra.mxu0 %v1462
        %v1589 = vpop.f32.mrf.mxu0
        %v1590 = vadd.f32 0.0, %v1589
        %1591 = vmatmul.f32.gmra.mxu0 %v1465
        %v1592 = vpop.f32.mrf.mxu0
        %v1593 = vadd.f32 0.0, %v1592
        %1594 = vmatmul.f32.gmra.mxu0 %v1468
        %v1595 = vpop.f32.mrf.mxu0
        %v1596 = vadd.f32 0.0, %v1595
        %1597 = vmatmul.f32.gmra.mxu0 %v1471
        %v1598 = vpop.f32.mrf.mxu0
        %v1599 = vadd.f32 0.0, %v1598
        %1600 = vmatmul.f32.gmra.mxu0 %v1474
        %v1601 = vpop.f32.mrf.mxu0
        %v1602 = vadd.f32 0.0, %v1601
        %1603 = vmatmul.f32.gmra.mxu0 %v1477
        %v1604 = vpop.f32.mrf.mxu0
        %v1605 = vadd.f32 0.0, %v1604
        %1606 = vmatmul.f32.gmra.mxu0 %v1480
        %v1607 = vpop.f32.mrf.mxu0
        %v1608 = vadd.f32 0.0, %v1607
        %1609 = vmatmul.f32.gmra.mxu0 %v1483
        %v1610 = vpop.f32.mrf.mxu0
        %v1611 = vadd.f32 0.0, %v1610
        %1612 = vmatmul.f32.gmra.mxu0 %v1486
        %v1613 = vpop.f32.mrf.mxu0
        %v1614 = vadd.f32 0.0, %v1613
        %1615 = vmatmul.f32.gmra.mxu0 %v1489
        %v1616 = vpop.f32.mrf.mxu0
        %v1617 = vadd.f32 0.0, %v1616
        %1618 = vmatmul.f32.gmra.mxu0 %v1492
        %v1619 = vpop.f32.mrf.mxu0
        %v1620 = vadd.f32 0.0, %v1619
        %1621 = vmatmul.f32.gmra.mxu0 %v1495
        %v1622 = vpop.f32.mrf.mxu0
        %v1623 = vadd.f32 0.0, %v1622
        %1624 = vmatmul.f32.gmra.mxu0 %v1498
        %v1625 = vpop.f32.mrf.mxu0
        %v1626 = vadd.f32 0.0, %v1625
        %1627 = vmatmul.f32.gmra.mxu0 %v1501
        %v1628 = vpop.f32.mrf.mxu0
        %v1629 = vadd.f32 0.0, %v1628
        %1630 = vmatmul.f32.gmra.mxu0 %v1504
        %v1631 = vpop.f32.mrf.mxu0
        %v1632 = vadd.f32 0.0, %v1631
        %1633 = vmatmul.f32.gmra.mxu0 %v1507
        %v1634 = vpop.f32.mrf.mxu0
        %v1635 = vadd.f32 0.0, %v1634
        %1636 = vmatmul.f32.gmra.mxu0 %v1510
        %v1637 = vpop.f32.mrf.mxu0
        %v1638 = vadd.f32 0.0, %v1637
        %1639 = vmatmul.f32.gmra.mxu0 %v1513
        %v1640 = vpop.f32.mrf.mxu0
        %v1641 = vadd.f32 0.0, %v1640
        %1642 = vmatmul.f32.gmra.mxu0 %v1516
        %v1643 = vpop.f32.mrf.mxu0
        %v1644 = vadd.f32 0.0, %v1643
        %1645 = vmatmul.f32.gmra.mxu0 %v1519
        %v1646 = vpop.f32.mrf.mxu0
        %v1647 = vadd.f32 0.0, %v1646
        %1648 = vmatmul.f32.gmra.mxu0 %v1522
        %v1649 = vpop.f32.mrf.mxu0
        %v1650 = vadd.f32 0.0, %v1649
        %1651 = vmatmul.f32.gmra.mxu0 %v1525
        %v1652 = vpop.f32.mrf.mxu0
        %v1653 = vadd.f32 0.0, %v1652
        %1654 = vmatmul.f32.gmra.mxu0 %v1528
        %v1655 = vpop.f32.mrf.mxu0
        %v1656 = vadd.f32 0.0, %v1655
        %1657 = vmatmul.f32.gmra.mxu0 %v1531
        %v1658 = vpop.f32.mrf.mxu0
        %v1659 = vadd.f32 0.0, %v1658
        %1660 = vmatmul.f32.gmra.mxu0 %v1534
        %v1661 = vpop.f32.mrf.mxu0
        %v1662 = vadd.f32 0.0, %v1661
        %1663 = vmatmul.f32.gmra.mxu0 %v1537
        %v1664 = vpop.f32.mrf.mxu0
        %v1665 = vadd.f32 0.0, %v1664
        %1666 = vmatmul.f32.gmra.mxu0 %v1540
        %v1667 = vpop.f32.mrf.mxu0
        %v1668 = vadd.f32 0.0, %v1667
        %1669 = vmatmul.f32.gmra.mxu0 %v1543
        %v1670 = vpop.f32.mrf.mxu0
        %v1671 = vadd.f32 0.0, %v1670
        %1672 = vmatmul.f32.gmra.mxu0 %v1546
        %v1673 = vpop.f32.mrf.mxu0
        %v1674 = vadd.f32 0.0, %v1673
        %1675 = vmatmul.f32.gmra.mxu0 %v1549
        %v1676 = vpop.f32.mrf.mxu0
        %v1677 = vadd.f32 0.0, %v1676
        %1678 = vmatmul.f32.gmra.mxu0 %v1552
        %v1679 = vpop.f32.mrf.mxu0
        %v1680 = vadd.f32 0.0, %v1679
        %1681 = vdwg.mxu0
        %v1682 = vadd.f32 %v1372, %v1575
        %v1683 = vadd.f32 %v1373, %v1578
        %v1684 = vadd.f32 %v1374, %v1581
        %v1685 = vadd.f32 %v1375, %v1584
        %v1686 = vadd.f32 %v1376, %v1587
        %v1687 = vadd.f32 %v1377, %v1590
        %v1688 = vadd.f32 %v1378, %v1593
        %v1689 = vadd.f32 %v1379, %v1596
        %v1690 = vadd.f32 %v1380, %v1599
        %v1691 = vadd.f32 %v1381, %v1602
        %v1692 = vadd.f32 %v1382, %v1605
        %v1693 = vadd.f32 %v1383, %v1608
        %v1694 = vadd.f32 %v1384, %v1611
        %v1695 = vadd.f32 %v1385, %v1614
        %v1696 = vadd.f32 %v1386, %v1617
        %v1697 = vadd.f32 %v1387, %v1620
        %v1698 = vadd.f32 %v1388, %v1623
        %v1699 = vadd.f32 %v1389, %v1626
        %v1700 = vadd.f32 %v1390, %v1629
        %v1701 = vadd.f32 %v1391, %v1632
        %v1702 = vadd.f32 %v1392, %v1635
        %v1703 = vadd.f32 %v1393, %v1638
        %v1704 = vadd.f32 %v1394, %v1641
        %v1705 = vadd.f32 %v1395, %v1644
        %v1706 = vadd.f32 %v1396, %v1647
        %v1707 = vadd.f32 %v1397, %v1650
        %v1708 = vadd.f32 %v1398, %v1653
        %v1709 = vadd.f32 %v1399, %v1656
        %v1710 = vadd.f32 %v1400, %v1659
        %v1711 = vadd.f32 %v1401, %v1662
        %v1712 = vadd.f32 %v1402, %v1665
        %v1713 = vadd.f32 %v1403, %v1668
        %v1714 = vadd.f32 %v1404, %v1671
        %v1715 = vadd.f32 %v1405, %v1674
        %v1716 = vadd.f32 %v1406, %v1677
        %v1717 = vadd.f32 %v1407, %v1680
        %v1718 = vld [vmem:[%s238 + $0x14] sm:$0xff]
        %v1719 = vld [vmem:[%s238 + $0x1c] sm:$0xff]
        %v1720 = vld [vmem:[%s238 + $0x24] sm:$0xff]
        %v1721 = vld [vmem:[%s238 + $0x2c] sm:$0xff]
        %v1722 = vld [vmem:[%s238 + $0x34] sm:$0xff]
        %v1723 = vld [vmem:[%s238 + $0x3c] sm:$0xff]
        %v1724 = vld [vmem:[%s238 + $0x44] sm:$0xff]
        %v1725 = vld [vmem:[%s238 + $0x4c] sm:$0xff]
        %v1726 = vld [vmem:[%s238 + $0x54] sm:$0xff]
        %v1727 = vld [vmem:[%s238 + $0x5c] sm:$0xff]
        %v1728 = vld [vmem:[%s238 + $0x64] sm:$0xff]
        %v1729 = vld [vmem:[%s238 + $0x6c] sm:$0xff]
        %v1730 = vld [vmem:[%s238 + $0x74] sm:$0xff]
        %v1731 = vld [vmem:[%s238 + $0x7c] sm:$0xff]
        %v1732 = vld [vmem:[%s238 + $0x84] sm:$0xff]
        %v1733 = vld [vmem:[%s238 + $0x8c] sm:$0xff]
        %v1734 = vld [vmem:[%s238 + $0x94] sm:$0xff]
        %v1735 = vld [vmem:[%s238 + $0x9c] sm:$0xff]
        %v1736 = vld [vmem:[%s238 + $0xa4] sm:$0xff]
        %v1737 = vld [vmem:[%s238 + $0xac] sm:$0xff]
        %v1738 = vld [vmem:[%s238 + $0xb4] sm:$0xff]
        %v1739 = vld [vmem:[%s238 + $0xbc] sm:$0xff]
        %v1740 = vld [vmem:[%s238 + $0xc4] sm:$0xff]
        %v1741 = vld [vmem:[%s238 + $0xcc] sm:$0xff]
        %v1742 = vld [vmem:[%s238 + $0xd4] sm:$0xff]
        %v1743 = vld [vmem:[%s238 + $0xdc] sm:$0xff]
        %v1744 = vld [vmem:[%s238 + $0xe4] sm:$0xff]
        %v1745 = vld [vmem:[%s238 + $0xec] sm:$0xff]
        %v1746 = vld [vmem:[%s238 + $0xf4] sm:$0xff]
        %v1747 = vld [vmem:[%s238 + $0xfc] sm:$0xff]
        %v1748 = vld [vmem:[%s238 + $0x104] sm:$0xff]
        %v1749 = vld [vmem:[%s238 + $0x10c] sm:$0xff]
        %v1750 = vld [vmem:[%s238 + $0x114] sm:$0xff]
        %v1751 = vld [vmem:[%s238 + $0x11c] sm:$0xff]
        %v1752 = vld [vmem:[%s238 + $0x124] sm:$0xff]
        %v1753 = vld [vmem:[%s238 + $0x12c] sm:$0xff]
        %s1754 = scalar_lea.vmem %s1, 20
        %v1755 = vld [vmem:[%s1754] sm:$0xf]
        %v1757 = vsel %vm314, %v1718, 0
        %v1760 = vsel %vm314, %v1719, 0
        %v1763 = vsel %vm314, %v1720, 0
        %v1766 = vsel %vm314, %v1721, 0
        %v1769 = vsel %vm314, %v1722, 0
        %v1772 = vsel %vm314, %v1723, 0
        %v1775 = vsel %vm314, %v1724, 0
        %v1778 = vsel %vm314, %v1725, 0
        %v1781 = vsel %vm314, %v1726, 0
        %v1784 = vsel %vm314, %v1727, 0
        %v1787 = vsel %vm314, %v1728, 0
        %v1790 = vsel %vm314, %v1729, 0
        %v1793 = vsel %vm314, %v1730, 0
        %v1796 = vsel %vm314, %v1731, 0
        %v1799 = vsel %vm314, %v1732, 0
        %v1802 = vsel %vm314, %v1733, 0
        %v1805 = vsel %vm314, %v1734, 0
        %v1808 = vsel %vm314, %v1735, 0
        %v1811 = vsel %vm314, %v1736, 0
        %v1814 = vsel %vm314, %v1737, 0
        %v1817 = vsel %vm314, %v1738, 0
        %v1820 = vsel %vm314, %v1739, 0
        %v1823 = vsel %vm314, %v1740, 0
        %v1826 = vsel %vm314, %v1741, 0
        %v1829 = vsel %vm314, %v1742, 0
        %v1832 = vsel %vm314, %v1743, 0
        %v1835 = vsel %vm314, %v1744, 0
        %v1838 = vsel %vm314, %v1745, 0
        %v1841 = vsel %vm314, %v1746, 0
        %v1844 = vsel %vm314, %v1747, 0
        %v1847 = vsel %vm314, %v1748, 0
        %v1850 = vsel %vm314, %v1749, 0
        %v1853 = vsel %vm314, %v1750, 0
        %v1856 = vsel %vm314, %v1751, 0
        %v1859 = vsel %vm314, %v1752, 0
        %v1862 = vsel %vm314, %v1753, 0
        %v1865 = vsel %vm423, %v1755, 0
        %1867 = vmatpush.msra.mxu0 0.0
        %1868 = vmatpush.msra.mxu0 0.0
        %1869 = vmatpush.msra.mxu0 0.0
        %1870 = vmatpush.msra.mxu0 0.0
        %1871 = vmatpush.msra.mxu0 0.0
        %1872 = vmatpush.msra.mxu0 0.0
        %1873 = vmatpush.msra.mxu0 0.0
        %1874 = vmatpush.msra.mxu0 0.0
        %1875 = vmatpush.msra.mxu0 0.0
        %1876 = vmatpush.msra.mxu0 0.0
        %1877 = vmatpush.msra.mxu0 0.0
        %1878 = vmatpush.msra.mxu0 0.0
        %1879 = vmatpush.msra.mxu0 0.0
        %1880 = vmatpush.msra.mxu0 0.0
        %1881 = vmatpush.msra.mxu0 0.0
        %1882 = vmatpush.msra.mxu0 %v1865
        %1883 = vmatmul.f32.gmra.mxu0 %v1757
        %v1884 = vpop.f32.mrf.mxu0
        %v1885 = vadd.f32 0.0, %v1884
        %1886 = vmatmul.f32.gmra.mxu0 %v1760
        %v1887 = vpop.f32.mrf.mxu0
        %v1888 = vadd.f32 0.0, %v1887
        %1889 = vmatmul.f32.gmra.mxu0 %v1763
        %v1890 = vpop.f32.mrf.mxu0
        %v1891 = vadd.f32 0.0, %v1890
        %1892 = vmatmul.f32.gmra.mxu0 %v1766
        %v1893 = vpop.f32.mrf.mxu0
        %v1894 = vadd.f32 0.0, %v1893
        %1895 = vmatmul.f32.gmra.mxu0 %v1769
        %v1896 = vpop.f32.mrf.mxu0
        %v1897 = vadd.f32 0.0, %v1896
        %1898 = vmatmul.f32.gmra.mxu0 %v1772
        %v1899 = vpop.f32.mrf.mxu0
        %v1900 = vadd.f32 0.0, %v1899
        %1901 = vmatmul.f32.gmra.mxu0 %v1775
        %v1902 = vpop.f32.mrf.mxu0
        %v1903 = vadd.f32 0.0, %v1902
        %1904 = vmatmul.f32.gmra.mxu0 %v1778
        %v1905 = vpop.f32.mrf.mxu0
        %v1906 = vadd.f32 0.0, %v1905
        %1907 = vmatmul.f32.gmra.mxu0 %v1781
        %v1908 = vpop.f32.mrf.mxu0
        %v1909 = vadd.f32 0.0, %v1908
        %1910 = vmatmul.f32.gmra.mxu0 %v1784
        %v1911 = vpop.f32.mrf.mxu0
        %v1912 = vadd.f32 0.0, %v1911
        %1913 = vmatmul.f32.gmra.mxu0 %v1787
        %v1914 = vpop.f32.mrf.mxu0
        %v1915 = vadd.f32 0.0, %v1914
        %1916 = vmatmul.f32.gmra.mxu0 %v1790
        %v1917 = vpop.f32.mrf.mxu0
        %v1918 = vadd.f32 0.0, %v1917
        %1919 = vmatmul.f32.gmra.mxu0 %v1793
        %v1920 = vpop.f32.mrf.mxu0
        %v1921 = vadd.f32 0.0, %v1920
        %1922 = vmatmul.f32.gmra.mxu0 %v1796
        %v1923 = vpop.f32.mrf.mxu0
        %v1924 = vadd.f32 0.0, %v1923
        %1925 = vmatmul.f32.gmra.mxu0 %v1799
        %v1926 = vpop.f32.mrf.mxu0
        %v1927 = vadd.f32 0.0, %v1926
        %1928 = vmatmul.f32.gmra.mxu0 %v1802
        %v1929 = vpop.f32.mrf.mxu0
        %v1930 = vadd.f32 0.0, %v1929
        %1931 = vmatmul.f32.gmra.mxu0 %v1805
        %v1932 = vpop.f32.mrf.mxu0
        %v1933 = vadd.f32 0.0, %v1932
        %1934 = vmatmul.f32.gmra.mxu0 %v1808
        %v1935 = vpop.f32.mrf.mxu0
        %v1936 = vadd.f32 0.0, %v1935
        %1937 = vmatmul.f32.gmra.mxu0 %v1811
        %v1938 = vpop.f32.mrf.mxu0
        %v1939 = vadd.f32 0.0, %v1938
        %1940 = vmatmul.f32.gmra.mxu0 %v1814
        %v1941 = vpop.f32.mrf.mxu0
        %v1942 = vadd.f32 0.0, %v1941
        %1943 = vmatmul.f32.gmra.mxu0 %v1817
        %v1944 = vpop.f32.mrf.mxu0
        %v1945 = vadd.f32 0.0, %v1944
        %1946 = vmatmul.f32.gmra.mxu0 %v1820
        %v1947 = vpop.f32.mrf.mxu0
        %v1948 = vadd.f32 0.0, %v1947
        %1949 = vmatmul.f32.gmra.mxu0 %v1823
        %v1950 = vpop.f32.mrf.mxu0
        %v1951 = vadd.f32 0.0, %v1950
        %1952 = vmatmul.f32.gmra.mxu0 %v1826
        %v1953 = vpop.f32.mrf.mxu0
        %v1954 = vadd.f32 0.0, %v1953
        %1955 = vmatmul.f32.gmra.mxu0 %v1829
        %v1956 = vpop.f32.mrf.mxu0
        %v1957 = vadd.f32 0.0, %v1956
        %1958 = vmatmul.f32.gmra.mxu0 %v1832
        %v1959 = vpop.f32.mrf.mxu0
        %v1960 = vadd.f32 0.0, %v1959
        %1961 = vmatmul.f32.gmra.mxu0 %v1835
        %v1962 = vpop.f32.mrf.mxu0
        %v1963 = vadd.f32 0.0, %v1962
        %1964 = vmatmul.f32.gmra.mxu0 %v1838
        %v1965 = vpop.f32.mrf.mxu0
        %v1966 = vadd.f32 0.0, %v1965
        %1967 = vmatmul.f32.gmra.mxu0 %v1841
        %v1968 = vpop.f32.mrf.mxu0
        %v1969 = vadd.f32 0.0, %v1968
        %1970 = vmatmul.f32.gmra.mxu0 %v1844
        %v1971 = vpop.f32.mrf.mxu0
        %v1972 = vadd.f32 0.0, %v1971
        %1973 = vmatmul.f32.gmra.mxu0 %v1847
        %v1974 = vpop.f32.mrf.mxu0
        %v1975 = vadd.f32 0.0, %v1974
        %1976 = vmatmul.f32.gmra.mxu0 %v1850
        %v1977 = vpop.f32.mrf.mxu0
        %v1978 = vadd.f32 0.0, %v1977
        %1979 = vmatmul.f32.gmra.mxu0 %v1853
        %v1980 = vpop.f32.mrf.mxu0
        %v1981 = vadd.f32 0.0, %v1980
        %1982 = vmatmul.f32.gmra.mxu0 %v1856
        %v1983 = vpop.f32.mrf.mxu0
        %v1984 = vadd.f32 0.0, %v1983
        %1985 = vmatmul.f32.gmra.mxu0 %v1859
        %v1986 = vpop.f32.mrf.mxu0
        %v1987 = vadd.f32 0.0, %v1986
        %1988 = vmatmul.f32.gmra.mxu0 %v1862
        %v1989 = vpop.f32.mrf.mxu0
        %v1990 = vadd.f32 0.0, %v1989
        %1991 = vdwg.mxu0
        %v1992 = vadd.f32 %v1682, %v1885
        %v1993 = vadd.f32 %v1683, %v1888
        %v1994 = vadd.f32 %v1684, %v1891
        %v1995 = vadd.f32 %v1685, %v1894
        %v1996 = vadd.f32 %v1686, %v1897
        %v1997 = vadd.f32 %v1687, %v1900
        %v1998 = vadd.f32 %v1688, %v1903
        %v1999 = vadd.f32 %v1689, %v1906
        %v2000 = vadd.f32 %v1690, %v1909
        %v2001 = vadd.f32 %v1691, %v1912
        %v2002 = vadd.f32 %v1692, %v1915
        %v2003 = vadd.f32 %v1693, %v1918
        %v2004 = vadd.f32 %v1694, %v1921
        %v2005 = vadd.f32 %v1695, %v1924
        %v2006 = vadd.f32 %v1696, %v1927
        %v2007 = vadd.f32 %v1697, %v1930
        %v2008 = vadd.f32 %v1698, %v1933
        %v2009 = vadd.f32 %v1699, %v1936
        %v2010 = vadd.f32 %v1700, %v1939
        %v2011 = vadd.f32 %v1701, %v1942
        %v2012 = vadd.f32 %v1702, %v1945
        %v2013 = vadd.f32 %v1703, %v1948
        %v2014 = vadd.f32 %v1704, %v1951
        %v2015 = vadd.f32 %v1705, %v1954
        %v2016 = vadd.f32 %v1706, %v1957
        %v2017 = vadd.f32 %v1707, %v1960
        %v2018 = vadd.f32 %v1708, %v1963
        %v2019 = vadd.f32 %v1709, %v1966
        %v2020 = vadd.f32 %v1710, %v1969
        %v2021 = vadd.f32 %v1711, %v1972
        %v2022 = vadd.f32 %v1712, %v1975
        %v2023 = vadd.f32 %v1713, %v1978
        %v2024 = vadd.f32 %v1714, %v1981
        %v2025 = vadd.f32 %v1715, %v1984
        %v2026 = vadd.f32 %v1716, %v1987
        %v2027 = vadd.f32 %v1717, %v1990
        %v2028 = vld [vmem:[%s238 + $0x24] sm:$0xff]
        %v2029 = vld [vmem:[%s238 + $0x2c] sm:$0xff]
        %v2030 = vld [vmem:[%s238 + $0x34] sm:$0xff]
        %v2031 = vld [vmem:[%s238 + $0x3c] sm:$0xff]
        %v2032 = vld [vmem:[%s238 + $0x44] sm:$0xff]
        %v2033 = vld [vmem:[%s238 + $0x4c] sm:$0xff]
        %v2034 = vld [vmem:[%s238 + $0x54] sm:$0xff]
        %v2035 = vld [vmem:[%s238 + $0x5c] sm:$0xff]
        %v2036 = vld [vmem:[%s238 + $0x64] sm:$0xff]
        %v2037 = vld [vmem:[%s238 + $0x6c] sm:$0xff]
        %v2038 = vld [vmem:[%s238 + $0x74] sm:$0xff]
        %v2039 = vld [vmem:[%s238 + $0x7c] sm:$0xff]
        %v2040 = vld [vmem:[%s238 + $0x84] sm:$0xff]
        %v2041 = vld [vmem:[%s238 + $0x8c] sm:$0xff]
        %v2042 = vld [vmem:[%s238 + $0x94] sm:$0xff]
        %v2043 = vld [vmem:[%s238 + $0x9c] sm:$0xff]
        %v2044 = vld [vmem:[%s238 + $0xa4] sm:$0xff]
        %v2045 = vld [vmem:[%s238 + $0xac] sm:$0xff]
        %v2046 = vld [vmem:[%s238 + $0xb4] sm:$0xff]
        %v2047 = vld [vmem:[%s238 + $0xbc] sm:$0xff]
        %v2048 = vld [vmem:[%s238 + $0xc4] sm:$0xff]
        %v2049 = vld [vmem:[%s238 + $0xcc] sm:$0xff]
        %v2050 = vld [vmem:[%s238 + $0xd4] sm:$0xff]
        %v2051 = vld [vmem:[%s238 + $0xdc] sm:$0xff]
        %v2052 = vld [vmem:[%s238 + $0xe4] sm:$0xff]
        %v2053 = vld [vmem:[%s238 + $0xec] sm:$0xff]
        %v2054 = vld [vmem:[%s238 + $0xf4] sm:$0xff]
        %v2055 = vld [vmem:[%s238 + $0xfc] sm:$0xff]
        %v2056 = vld [vmem:[%s238 + $0x104] sm:$0xff]
        %v2057 = vld [vmem:[%s238 + $0x10c] sm:$0xff]
        %v2058 = vld [vmem:[%s238 + $0x114] sm:$0xff]
        %v2059 = vld [vmem:[%s238 + $0x11c] sm:$0xff]
        %v2060 = vld [vmem:[%s238 + $0x124] sm:$0xff]
        %v2061 = vld [vmem:[%s238 + $0x12c] sm:$0xff]
        %v2062 = vld [vmem:[%s238 + $0x134] sm:$0xff]
        %v2063 = vld [vmem:[%s238 + $0x13c] sm:$0xff]
        %s2064 = scalar_lea.vmem %s1, 24
        %v2065 = vld [vmem:[%s2064] sm:$0xf]
        %v2067 = vsel %vm314, %v2028, 0
        %v2070 = vsel %vm314, %v2029, 0
        %v2073 = vsel %vm314, %v2030, 0
        %v2076 = vsel %vm314, %v2031, 0
        %v2079 = vsel %vm314, %v2032, 0
        %v2082 = vsel %vm314, %v2033, 0
        %v2085 = vsel %vm314, %v2034, 0
        %v2088 = vsel %vm314, %v2035, 0
        %v2091 = vsel %vm314, %v2036, 0
        %v2094 = vsel %vm314, %v2037, 0
        %v2097 = vsel %vm314, %v2038, 0
        %v2100 = vsel %vm314, %v2039, 0
        %v2103 = vsel %vm314, %v2040, 0
        %v2106 = vsel %vm314, %v2041, 0
        %v2109 = vsel %vm314, %v2042, 0
        %v2112 = vsel %vm314, %v2043, 0
        %v2115 = vsel %vm314, %v2044, 0
        %v2118 = vsel %vm314, %v2045, 0
        %v2121 = vsel %vm314, %v2046, 0
        %v2124 = vsel %vm314, %v2047, 0
        %v2127 = vsel %vm314, %v2048, 0
        %v2130 = vsel %vm314, %v2049, 0
        %v2133 = vsel %vm314, %v2050, 0
        %v2136 = vsel %vm314, %v2051, 0
        %v2139 = vsel %vm314, %v2052, 0
        %v2142 = vsel %vm314, %v2053, 0
        %v2145 = vsel %vm314, %v2054, 0
        %v2148 = vsel %vm314, %v2055, 0
        %v2151 = vsel %vm314, %v2056, 0
        %v2154 = vsel %vm314, %v2057, 0
        %v2157 = vsel %vm314, %v2058, 0
        %v2160 = vsel %vm314, %v2059, 0
        %v2163 = vsel %vm314, %v2060, 0
        %v2166 = vsel %vm314, %v2061, 0
        %v2169 = vsel %vm314, %v2062, 0
        %v2172 = vsel %vm314, %v2063, 0
        %v2175 = vsel %vm423, %v2065, 0
        %2177 = vmatpush.msra.mxu0 0.0
        %2178 = vmatpush.msra.mxu0 0.0
        %2179 = vmatpush.msra.mxu0 0.0
        %2180 = vmatpush.msra.mxu0 0.0
        %2181 = vmatpush.msra.mxu0 0.0
        %2182 = vmatpush.msra.mxu0 0.0
        %2183 = vmatpush.msra.mxu0 0.0
        %2184 = vmatpush.msra.mxu0 0.0
        %2185 = vmatpush.msra.mxu0 0.0
        %2186 = vmatpush.msra.mxu0 0.0
        %2187 = vmatpush.msra.mxu0 0.0
        %2188 = vmatpush.msra.mxu0 0.0
        %2189 = vmatpush.msra.mxu0 0.0
        %2190 = vmatpush.msra.mxu0 0.0
        %2191 = vmatpush.msra.mxu0 0.0
        %2192 = vmatpush.msra.mxu0 %v2175
        %2193 = vmatmul.f32.gmra.mxu0 %v2067
        %v2194 = vpop.f32.mrf.mxu0
        %v2195 = vadd.f32 0.0, %v2194
        %2196 = vmatmul.f32.gmra.mxu0 %v2070
        %v2197 = vpop.f32.mrf.mxu0
        %v2198 = vadd.f32 0.0, %v2197
        %2199 = vmatmul.f32.gmra.mxu0 %v2073
        %v2200 = vpop.f32.mrf.mxu0
        %v2201 = vadd.f32 0.0, %v2200
        %2202 = vmatmul.f32.gmra.mxu0 %v2076
        %v2203 = vpop.f32.mrf.mxu0
        %v2204 = vadd.f32 0.0, %v2203
        %2205 = vmatmul.f32.gmra.mxu0 %v2079
        %v2206 = vpop.f32.mrf.mxu0
        %v2207 = vadd.f32 0.0, %v2206
        %2208 = vmatmul.f32.gmra.mxu0 %v2082
        %v2209 = vpop.f32.mrf.mxu0
        %v2210 = vadd.f32 0.0, %v2209
        %2211 = vmatmul.f32.gmra.mxu0 %v2085
        %v2212 = vpop.f32.mrf.mxu0
        %v2213 = vadd.f32 0.0, %v2212
        %2214 = vmatmul.f32.gmra.mxu0 %v2088
        %v2215 = vpop.f32.mrf.mxu0
        %v2216 = vadd.f32 0.0, %v2215
        %2217 = vmatmul.f32.gmra.mxu0 %v2091
        %v2218 = vpop.f32.mrf.mxu0
        %v2219 = vadd.f32 0.0, %v2218
        %2220 = vmatmul.f32.gmra.mxu0 %v2094
        %v2221 = vpop.f32.mrf.mxu0
        %v2222 = vadd.f32 0.0, %v2221
        %2223 = vmatmul.f32.gmra.mxu0 %v2097
        %v2224 = vpop.f32.mrf.mxu0
        %v2225 = vadd.f32 0.0, %v2224
        %2226 = vmatmul.f32.gmra.mxu0 %v2100
        %v2227 = vpop.f32.mrf.mxu0
        %v2228 = vadd.f32 0.0, %v2227
        %2229 = vmatmul.f32.gmra.mxu0 %v2103
        %v2230 = vpop.f32.mrf.mxu0
        %v2231 = vadd.f32 0.0, %v2230
        %2232 = vmatmul.f32.gmra.mxu0 %v2106
        %v2233 = vpop.f32.mrf.mxu0
        %v2234 = vadd.f32 0.0, %v2233
        %2235 = vmatmul.f32.gmra.mxu0 %v2109
        %v2236 = vpop.f32.mrf.mxu0
        %v2237 = vadd.f32 0.0, %v2236
        %2238 = vmatmul.f32.gmra.mxu0 %v2112
        %v2239 = vpop.f32.mrf.mxu0
        %v2240 = vadd.f32 0.0, %v2239
        %2241 = vmatmul.f32.gmra.mxu0 %v2115
        %v2242 = vpop.f32.mrf.mxu0
        %v2243 = vadd.f32 0.0, %v2242
        %2244 = vmatmul.f32.gmra.mxu0 %v2118
        %v2245 = vpop.f32.mrf.mxu0
        %v2246 = vadd.f32 0.0, %v2245
        %2247 = vmatmul.f32.gmra.mxu0 %v2121
        %v2248 = vpop.f32.mrf.mxu0
        %v2249 = vadd.f32 0.0, %v2248
        %2250 = vmatmul.f32.gmra.mxu0 %v2124
        %v2251 = vpop.f32.mrf.mxu0
        %v2252 = vadd.f32 0.0, %v2251
        %2253 = vmatmul.f32.gmra.mxu0 %v2127
        %v2254 = vpop.f32.mrf.mxu0
        %v2255 = vadd.f32 0.0, %v2254
        %2256 = vmatmul.f32.gmra.mxu0 %v2130
        %v2257 = vpop.f32.mrf.mxu0
        %v2258 = vadd.f32 0.0, %v2257
        %2259 = vmatmul.f32.gmra.mxu0 %v2133
        %v2260 = vpop.f32.mrf.mxu0
        %v2261 = vadd.f32 0.0, %v2260
        %2262 = vmatmul.f32.gmra.mxu0 %v2136
        %v2263 = vpop.f32.mrf.mxu0
        %v2264 = vadd.f32 0.0, %v2263
        %2265 = vmatmul.f32.gmra.mxu0 %v2139
        %v2266 = vpop.f32.mrf.mxu0
        %v2267 = vadd.f32 0.0, %v2266
        %2268 = vmatmul.f32.gmra.mxu0 %v2142
        %v2269 = vpop.f32.mrf.mxu0
        %v2270 = vadd.f32 0.0, %v2269
        %2271 = vmatmul.f32.gmra.mxu0 %v2145
        %v2272 = vpop.f32.mrf.mxu0
        %v2273 = vadd.f32 0.0, %v2272
        %2274 = vmatmul.f32.gmra.mxu0 %v2148
        %v2275 = vpop.f32.mrf.mxu0
        %v2276 = vadd.f32 0.0, %v2275
        %2277 = vmatmul.f32.gmra.mxu0 %v2151
        %v2278 = vpop.f32.mrf.mxu0
        %v2279 = vadd.f32 0.0, %v2278
        %2280 = vmatmul.f32.gmra.mxu0 %v2154
        %v2281 = vpop.f32.mrf.mxu0
        %v2282 = vadd.f32 0.0, %v2281
        %2283 = vmatmul.f32.gmra.mxu0 %v2157
        %v2284 = vpop.f32.mrf.mxu0
        %v2285 = vadd.f32 0.0, %v2284
        %2286 = vmatmul.f32.gmra.mxu0 %v2160
        %v2287 = vpop.f32.mrf.mxu0
        %v2288 = vadd.f32 0.0, %v2287
        %2289 = vmatmul.f32.gmra.mxu0 %v2163
        %v2290 = vpop.f32.mrf.mxu0
        %v2291 = vadd.f32 0.0, %v2290
        %2292 = vmatmul.f32.gmra.mxu0 %v2166
        %v2293 = vpop.f32.mrf.mxu0
        %v2294 = vadd.f32 0.0, %v2293
        %2295 = vmatmul.f32.gmra.mxu0 %v2169
        %v2296 = vpop.f32.mrf.mxu0
        %v2297 = vadd.f32 0.0, %v2296
        %2298 = vmatmul.f32.gmra.mxu0 %v2172
        %v2299 = vpop.f32.mrf.mxu0
        %v2300 = vadd.f32 0.0, %v2299
        %2301 = vdwg.mxu0
        %v2302 = vadd.f32 %v1992, %v2195
        %v2303 = vadd.f32 %v1993, %v2198
        %v2304 = vadd.f32 %v1994, %v2201
        %v2305 = vadd.f32 %v1995, %v2204
        %v2306 = vadd.f32 %v1996, %v2207
        %v2307 = vadd.f32 %v1997, %v2210
        %v2308 = vadd.f32 %v1998, %v2213
        %v2309 = vadd.f32 %v1999, %v2216
        %v2310 = vadd.f32 %v2000, %v2219
        %v2311 = vadd.f32 %v2001, %v2222
        %v2312 = vadd.f32 %v2002, %v2225
        %v2313 = vadd.f32 %v2003, %v2228
        %v2314 = vadd.f32 %v2004, %v2231
        %v2315 = vadd.f32 %v2005, %v2234
        %v2316 = vadd.f32 %v2006, %v2237
        %v2317 = vadd.f32 %v2007, %v2240
        %v2318 = vadd.f32 %v2008, %v2243
        %v2319 = vadd.f32 %v2009, %v2246
        %v2320 = vadd.f32 %v2010, %v2249
        %v2321 = vadd.f32 %v2011, %v2252
        %v2322 = vadd.f32 %v2012, %v2255
        %v2323 = vadd.f32 %v2013, %v2258
        %v2324 = vadd.f32 %v2014, %v2261
        %v2325 = vadd.f32 %v2015, %v2264
        %v2326 = vadd.f32 %v2016, %v2267
        %v2327 = vadd.f32 %v2017, %v2270
        %v2328 = vadd.f32 %v2018, %v2273
        %v2329 = vadd.f32 %v2019, %v2276
        %v2330 = vadd.f32 %v2020, %v2279
        %v2331 = vadd.f32 %v2021, %v2282
        %v2332 = vadd.f32 %v2022, %v2285
        %v2333 = vadd.f32 %v2023, %v2288
        %v2334 = vadd.f32 %v2024, %v2291
        %v2335 = vadd.f32 %v2025, %v2294
        %v2336 = vadd.f32 %v2026, %v2297
        %v2337 = vadd.f32 %v2027, %v2300
        %v2338 = vld [vmem:[%s238 + $0x25] sm:$0xff]
        %v2339 = vld [vmem:[%s238 + $0x2d] sm:$0xff]
        %v2340 = vld [vmem:[%s238 + $0x35] sm:$0xff]
        %v2341 = vld [vmem:[%s238 + $0x3d] sm:$0xff]
        %v2342 = vld [vmem:[%s238 + $0x45] sm:$0xff]
        %v2343 = vld [vmem:[%s238 + $0x4d] sm:$0xff]
        %v2344 = vld [vmem:[%s238 + $0x55] sm:$0xff]
        %v2345 = vld [vmem:[%s238 + $0x5d] sm:$0xff]
        %v2346 = vld [vmem:[%s238 + $0x65] sm:$0xff]
        %v2347 = vld [vmem:[%s238 + $0x6d] sm:$0xff]
        %v2348 = vld [vmem:[%s238 + $0x75] sm:$0xff]
        %v2349 = vld [vmem:[%s238 + $0x7d] sm:$0xff]
        %v2350 = vld [vmem:[%s238 + $0x85] sm:$0xff]
        %v2351 = vld [vmem:[%s238 + $0x8d] sm:$0xff]
        %v2352 = vld [vmem:[%s238 + $0x95] sm:$0xff]
        %v2353 = vld [vmem:[%s238 + $0x9d] sm:$0xff]
        %v2354 = vld [vmem:[%s238 + $0xa5] sm:$0xff]
        %v2355 = vld [vmem:[%s238 + $0xad] sm:$0xff]
        %v2356 = vld [vmem:[%s238 + $0xb5] sm:$0xff]
        %v2357 = vld [vmem:[%s238 + $0xbd] sm:$0xff]
        %v2358 = vld [vmem:[%s238 + $0xc5] sm:$0xff]
        %v2359 = vld [vmem:[%s238 + $0xcd] sm:$0xff]
        %v2360 = vld [vmem:[%s238 + $0xd5] sm:$0xff]
        %v2361 = vld [vmem:[%s238 + $0xdd] sm:$0xff]
        %v2362 = vld [vmem:[%s238 + $0xe5] sm:$0xff]
        %v2363 = vld [vmem:[%s238 + $0xed] sm:$0xff]
        %v2364 = vld [vmem:[%s238 + $0xf5] sm:$0xff]
        %v2365 = vld [vmem:[%s238 + $0xfd] sm:$0xff]
        %v2366 = vld [vmem:[%s238 + $0x105] sm:$0xff]
        %v2367 = vld [vmem:[%s238 + $0x10d] sm:$0xff]
        %v2368 = vld [vmem:[%s238 + $0x115] sm:$0xff]
        %v2369 = vld [vmem:[%s238 + $0x11d] sm:$0xff]
        %v2370 = vld [vmem:[%s238 + $0x125] sm:$0xff]
        %v2371 = vld [vmem:[%s238 + $0x12d] sm:$0xff]
        %v2372 = vld [vmem:[%s238 + $0x135] sm:$0xff]
        %v2373 = vld [vmem:[%s238 + $0x13d] sm:$0xff]
        %s2374 = scalar_lea.vmem %s1, 28
        %v2375 = vld [vmem:[%s2374] sm:$0xf]
        %v2377 = vsel %vm314, %v2338, 0
        %v2380 = vsel %vm314, %v2339, 0
        %v2383 = vsel %vm314, %v2340, 0
        %v2386 = vsel %vm314, %v2341, 0
        %v2389 = vsel %vm314, %v2342, 0
        %v2392 = vsel %vm314, %v2343, 0
        %v2395 = vsel %vm314, %v2344, 0
        %v2398 = vsel %vm314, %v2345, 0
        %v2401 = vsel %vm314, %v2346, 0
        %v2404 = vsel %vm314, %v2347, 0
        %v2407 = vsel %vm314, %v2348, 0
        %v2410 = vsel %vm314, %v2349, 0
        %v2413 = vsel %vm314, %v2350, 0
        %v2416 = vsel %vm314, %v2351, 0
        %v2419 = vsel %vm314, %v2352, 0
        %v2422 = vsel %vm314, %v2353, 0
        %v2425 = vsel %vm314, %v2354, 0
        %v2428 = vsel %vm314, %v2355, 0
        %v2431 = vsel %vm314, %v2356, 0
        %v2434 = vsel %vm314, %v2357, 0
        %v2437 = vsel %vm314, %v2358, 0
        %v2440 = vsel %vm314, %v2359, 0
        %v2443 = vsel %vm314, %v2360, 0
        %v2446 = vsel %vm314, %v2361, 0
        %v2449 = vsel %vm314, %v2362, 0
        %v2452 = vsel %vm314, %v2363, 0
        %v2455 = vsel %vm314, %v2364, 0
        %v2458 = vsel %vm314, %v2365, 0
        %v2461 = vsel %vm314, %v2366, 0
        %v2464 = vsel %vm314, %v2367, 0
        %v2467 = vsel %vm314, %v2368, 0
        %v2470 = vsel %vm314, %v2369, 0
        %v2473 = vsel %vm314, %v2370, 0
        %v2476 = vsel %vm314, %v2371, 0
        %v2479 = vsel %vm314, %v2372, 0
        %v2482 = vsel %vm314, %v2373, 0
        %v2485 = vsel %vm423, %v2375, 0
        %2487 = vmatpush.msra.mxu0 0.0
        %2488 = vmatpush.msra.mxu0 0.0
        %2489 = vmatpush.msra.mxu0 0.0
        %2490 = vmatpush.msra.mxu0 0.0
        %2491 = vmatpush.msra.mxu0 0.0
        %2492 = vmatpush.msra.mxu0 0.0
        %2493 = vmatpush.msra.mxu0 0.0
        %2494 = vmatpush.msra.mxu0 0.0
        %2495 = vmatpush.msra.mxu0 0.0
        %2496 = vmatpush.msra.mxu0 0.0
        %2497 = vmatpush.msra.mxu0 0.0
        %2498 = vmatpush.msra.mxu0 0.0
        %2499 = vmatpush.msra.mxu0 0.0
        %2500 = vmatpush.msra.mxu0 0.0
        %2501 = vmatpush.msra.mxu0 0.0
        %2502 = vmatpush.msra.mxu0 %v2485
        %2503 = vmatmul.f32.gmra.mxu0 %v2377
        %v2504 = vpop.f32.mrf.mxu0
        %v2505 = vadd.f32 0.0, %v2504
        %2506 = vmatmul.f32.gmra.mxu0 %v2380
        %v2507 = vpop.f32.mrf.mxu0
        %v2508 = vadd.f32 0.0, %v2507
        %2509 = vmatmul.f32.gmra.mxu0 %v2383
        %v2510 = vpop.f32.mrf.mxu0
        %v2511 = vadd.f32 0.0, %v2510
        %2512 = vmatmul.f32.gmra.mxu0 %v2386
        %v2513 = vpop.f32.mrf.mxu0
        %v2514 = vadd.f32 0.0, %v2513
        %2515 = vmatmul.f32.gmra.mxu0 %v2389
        %v2516 = vpop.f32.mrf.mxu0
        %v2517 = vadd.f32 0.0, %v2516
        %2518 = vmatmul.f32.gmra.mxu0 %v2392
        %v2519 = vpop.f32.mrf.mxu0
        %v2520 = vadd.f32 0.0, %v2519
        %2521 = vmatmul.f32.gmra.mxu0 %v2395
        %v2522 = vpop.f32.mrf.mxu0
        %v2523 = vadd.f32 0.0, %v2522
        %2524 = vmatmul.f32.gmra.mxu0 %v2398
        %v2525 = vpop.f32.mrf.mxu0
        %v2526 = vadd.f32 0.0, %v2525
        %2527 = vmatmul.f32.gmra.mxu0 %v2401
        %v2528 = vpop.f32.mrf.mxu0
        %v2529 = vadd.f32 0.0, %v2528
        %2530 = vmatmul.f32.gmra.mxu0 %v2404
        %v2531 = vpop.f32.mrf.mxu0
        %v2532 = vadd.f32 0.0, %v2531
        %2533 = vmatmul.f32.gmra.mxu0 %v2407
        %v2534 = vpop.f32.mrf.mxu0
        %v2535 = vadd.f32 0.0, %v2534
        %2536 = vmatmul.f32.gmra.mxu0 %v2410
        %v2537 = vpop.f32.mrf.mxu0
        %v2538 = vadd.f32 0.0, %v2537
        %2539 = vmatmul.f32.gmra.mxu0 %v2413
        %v2540 = vpop.f32.mrf.mxu0
        %v2541 = vadd.f32 0.0, %v2540
        %2542 = vmatmul.f32.gmra.mxu0 %v2416
        %v2543 = vpop.f32.mrf.mxu0
        %v2544 = vadd.f32 0.0, %v2543
        %2545 = vmatmul.f32.gmra.mxu0 %v2419
        %v2546 = vpop.f32.mrf.mxu0
        %v2547 = vadd.f32 0.0, %v2546
        %2548 = vmatmul.f32.gmra.mxu0 %v2422
        %v2549 = vpop.f32.mrf.mxu0
        %v2550 = vadd.f32 0.0, %v2549
        %2551 = vmatmul.f32.gmra.mxu0 %v2425
        %v2552 = vpop.f32.mrf.mxu0
        %v2553 = vadd.f32 0.0, %v2552
        %2554 = vmatmul.f32.gmra.mxu0 %v2428
        %v2555 = vpop.f32.mrf.mxu0
        %v2556 = vadd.f32 0.0, %v2555
        %2557 = vmatmul.f32.gmra.mxu0 %v2431
        %v2558 = vpop.f32.mrf.mxu0
        %v2559 = vadd.f32 0.0, %v2558
        %2560 = vmatmul.f32.gmra.mxu0 %v2434
        %v2561 = vpop.f32.mrf.mxu0
        %v2562 = vadd.f32 0.0, %v2561
        %2563 = vmatmul.f32.gmra.mxu0 %v2437
        %v2564 = vpop.f32.mrf.mxu0
        %v2565 = vadd.f32 0.0, %v2564
        %2566 = vmatmul.f32.gmra.mxu0 %v2440
        %v2567 = vpop.f32.mrf.mxu0
        %v2568 = vadd.f32 0.0, %v2567
        %2569 = vmatmul.f32.gmra.mxu0 %v2443
        %v2570 = vpop.f32.mrf.mxu0
        %v2571 = vadd.f32 0.0, %v2570
        %2572 = vmatmul.f32.gmra.mxu0 %v2446
        %v2573 = vpop.f32.mrf.mxu0
        %v2574 = vadd.f32 0.0, %v2573
        %2575 = vmatmul.f32.gmra.mxu0 %v2449
        %v2576 = vpop.f32.mrf.mxu0
        %v2577 = vadd.f32 0.0, %v2576
        %2578 = vmatmul.f32.gmra.mxu0 %v2452
        %v2579 = vpop.f32.mrf.mxu0
        %v2580 = vadd.f32 0.0, %v2579
        %2581 = vmatmul.f32.gmra.mxu0 %v2455
        %v2582 = vpop.f32.mrf.mxu0
        %v2583 = vadd.f32 0.0, %v2582
        %2584 = vmatmul.f32.gmra.mxu0 %v2458
        %v2585 = vpop.f32.mrf.mxu0
        %v2586 = vadd.f32 0.0, %v2585
        %2587 = vmatmul.f32.gmra.mxu0 %v2461
        %v2588 = vpop.f32.mrf.mxu0
        %v2589 = vadd.f32 0.0, %v2588
        %2590 = vmatmul.f32.gmra.mxu0 %v2464
        %v2591 = vpop.f32.mrf.mxu0
        %v2592 = vadd.f32 0.0, %v2591
        %2593 = vmatmul.f32.gmra.mxu0 %v2467
        %v2594 = vpop.f32.mrf.mxu0
        %v2595 = vadd.f32 0.0, %v2594
        %2596 = vmatmul.f32.gmra.mxu0 %v2470
        %v2597 = vpop.f32.mrf.mxu0
        %v2598 = vadd.f32 0.0, %v2597
        %2599 = vmatmul.f32.gmra.mxu0 %v2473
        %v2600 = vpop.f32.mrf.mxu0
        %v2601 = vadd.f32 0.0, %v2600
        %2602 = vmatmul.f32.gmra.mxu0 %v2476
        %v2603 = vpop.f32.mrf.mxu0
        %v2604 = vadd.f32 0.0, %v2603
        %2605 = vmatmul.f32.gmra.mxu0 %v2479
        %v2606 = vpop.f32.mrf.mxu0
        %v2607 = vadd.f32 0.0, %v2606
        %2608 = vmatmul.f32.gmra.mxu0 %v2482
        %v2609 = vpop.f32.mrf.mxu0
        %v2610 = vadd.f32 0.0, %v2609
        %2611 = vdwg.mxu0
        %v2612 = vadd.f32 %v2302, %v2505
        %v2613 = vadd.f32 %v2303, %v2508
        %v2614 = vadd.f32 %v2304, %v2511
        %v2615 = vadd.f32 %v2305, %v2514
        %v2616 = vadd.f32 %v2306, %v2517
        %v2617 = vadd.f32 %v2307, %v2520
        %v2618 = vadd.f32 %v2308, %v2523
        %v2619 = vadd.f32 %v2309, %v2526
        %v2620 = vadd.f32 %v2310, %v2529
        %v2621 = vadd.f32 %v2311, %v2532
        %v2622 = vadd.f32 %v2312, %v2535
        %v2623 = vadd.f32 %v2313, %v2538
        %v2624 = vadd.f32 %v2314, %v2541
        %v2625 = vadd.f32 %v2315, %v2544
        %v2626 = vadd.f32 %v2316, %v2547
        %v2627 = vadd.f32 %v2317, %v2550
        %v2628 = vadd.f32 %v2318, %v2553
        %v2629 = vadd.f32 %v2319, %v2556
        %v2630 = vadd.f32 %v2320, %v2559
        %v2631 = vadd.f32 %v2321, %v2562
        %v2632 = vadd.f32 %v2322, %v2565
        %v2633 = vadd.f32 %v2323, %v2568
        %v2634 = vadd.f32 %v2324, %v2571
        %v2635 = vadd.f32 %v2325, %v2574
        %v2636 = vadd.f32 %v2326, %v2577
        %v2637 = vadd.f32 %v2327, %v2580
        %v2638 = vadd.f32 %v2328, %v2583
        %v2639 = vadd.f32 %v2329, %v2586
        %v2640 = vadd.f32 %v2330, %v2589
        %v2641 = vadd.f32 %v2331, %v2592
        %v2642 = vadd.f32 %v2332, %v2595
        %v2643 = vadd.f32 %v2333, %v2598
        %v2644 = vadd.f32 %v2334, %v2601
        %v2645 = vadd.f32 %v2335, %v2604
        %v2646 = vadd.f32 %v2336, %v2607
        %v2647 = vadd.f32 %v2337, %v2610
        %v2648 = vld [vmem:[%s238 + $0x26] sm:$0xff]
        %v2649 = vld [vmem:[%s238 + $0x2e] sm:$0xff]
        %v2650 = vld [vmem:[%s238 + $0x36] sm:$0xff]
        %v2651 = vld [vmem:[%s238 + $0x3e] sm:$0xff]
        %v2652 = vld [vmem:[%s238 + $0x46] sm:$0xff]
        %v2653 = vld [vmem:[%s238 + $0x4e] sm:$0xff]
        %v2654 = vld [vmem:[%s238 + $0x56] sm:$0xff]
        %v2655 = vld [vmem:[%s238 + $0x5e] sm:$0xff]
        %v2656 = vld [vmem:[%s238 + $0x66] sm:$0xff]
        %v2657 = vld [vmem:[%s238 + $0x6e] sm:$0xff]
        %v2658 = vld [vmem:[%s238 + $0x76] sm:$0xff]
        %v2659 = vld [vmem:[%s238 + $0x7e] sm:$0xff]
        %v2660 = vld [vmem:[%s238 + $0x86] sm:$0xff]
        %v2661 = vld [vmem:[%s238 + $0x8e] sm:$0xff]
        %v2662 = vld [vmem:[%s238 + $0x96] sm:$0xff]
        %v2663 = vld [vmem:[%s238 + $0x9e] sm:$0xff]
        %v2664 = vld [vmem:[%s238 + $0xa6] sm:$0xff]
        %v2665 = vld [vmem:[%s238 + $0xae] sm:$0xff]
        %v2666 = vld [vmem:[%s238 + $0xb6] sm:$0xff]
        %v2667 = vld [vmem:[%s238 + $0xbe] sm:$0xff]
        %v2668 = vld [vmem:[%s238 + $0xc6] sm:$0xff]
        %v2669 = vld [vmem:[%s238 + $0xce] sm:$0xff]
        %v2670 = vld [vmem:[%s238 + $0xd6] sm:$0xff]
        %v2671 = vld [vmem:[%s238 + $0xde] sm:$0xff]
        %v2672 = vld [vmem:[%s238 + $0xe6] sm:$0xff]
        %v2673 = vld [vmem:[%s238 + $0xee] sm:$0xff]
        %v2674 = vld [vmem:[%s238 + $0xf6] sm:$0xff]
        %v2675 = vld [vmem:[%s238 + $0xfe] sm:$0xff]
        %v2676 = vld [vmem:[%s238 + $0x106] sm:$0xff]
        %v2677 = vld [vmem:[%s238 + $0x10e] sm:$0xff]
        %v2678 = vld [vmem:[%s238 + $0x116] sm:$0xff]
        %v2679 = vld [vmem:[%s238 + $0x11e] sm:$0xff]
        %v2680 = vld [vmem:[%s238 + $0x126] sm:$0xff]
        %v2681 = vld [vmem:[%s238 + $0x12e] sm:$0xff]
        %v2682 = vld [vmem:[%s238 + $0x136] sm:$0xff]
        %v2683 = vld [vmem:[%s238 + $0x13e] sm:$0xff]
        %s2684 = scalar_lea.vmem %s1, 32
        %v2685 = vld [vmem:[%s2684] sm:$0xf]
        %v2687 = vsel %vm314, %v2648, 0
        %v2690 = vsel %vm314, %v2649, 0
        %v2693 = vsel %vm314, %v2650, 0
        %v2696 = vsel %vm314, %v2651, 0
        %v2699 = vsel %vm314, %v2652, 0
        %v2702 = vsel %vm314, %v2653, 0
        %v2705 = vsel %vm314, %v2654, 0
        %v2708 = vsel %vm314, %v2655, 0
        %v2711 = vsel %vm314, %v2656, 0
        %v2714 = vsel %vm314, %v2657, 0
        %v2717 = vsel %vm314, %v2658, 0
        %v2720 = vsel %vm314, %v2659, 0
        %v2723 = vsel %vm314, %v2660, 0
        %v2726 = vsel %vm314, %v2661, 0
        %v2729 = vsel %vm314, %v2662, 0
        %v2732 = vsel %vm314, %v2663, 0
        %v2735 = vsel %vm314, %v2664, 0
        %v2738 = vsel %vm314, %v2665, 0
        %v2741 = vsel %vm314, %v2666, 0
        %v2744 = vsel %vm314, %v2667, 0
        %v2747 = vsel %vm314, %v2668, 0
        %v2750 = vsel %vm314, %v2669, 0
        %v2753 = vsel %vm314, %v2670, 0
        %v2756 = vsel %vm314, %v2671, 0
        %v2759 = vsel %vm314, %v2672, 0
        %v2762 = vsel %vm314, %v2673, 0
        %v2765 = vsel %vm314, %v2674, 0
        %v2768 = vsel %vm314, %v2675, 0
        %v2771 = vsel %vm314, %v2676, 0
        %v2774 = vsel %vm314, %v2677, 0
        %v2777 = vsel %vm314, %v2678, 0
        %v2780 = vsel %vm314, %v2679, 0
        %v2783 = vsel %vm314, %v2680, 0
        %v2786 = vsel %vm314, %v2681, 0
        %v2789 = vsel %vm314, %v2682, 0
        %v2792 = vsel %vm314, %v2683, 0
        %v2795 = vsel %vm423, %v2685, 0
        %2797 = vmatpush.msra.mxu0 0.0
        %2798 = vmatpush.msra.mxu0 0.0
        %2799 = vmatpush.msra.mxu0 0.0
        %2800 = vmatpush.msra.mxu0 0.0
        %2801 = vmatpush.msra.mxu0 0.0
        %2802 = vmatpush.msra.mxu0 0.0
        %2803 = vmatpush.msra.mxu0 0.0
        %2804 = vmatpush.msra.mxu0 0.0
        %2805 = vmatpush.msra.mxu0 0.0
        %2806 = vmatpush.msra.mxu0 0.0
        %2807 = vmatpush.msra.mxu0 0.0
        %2808 = vmatpush.msra.mxu0 0.0
        %2809 = vmatpush.msra.mxu0 0.0
        %2810 = vmatpush.msra.mxu0 0.0
        %2811 = vmatpush.msra.mxu0 0.0
        %2812 = vmatpush.msra.mxu0 %v2795
        %2813 = vmatmul.f32.gmra.mxu0 %v2687
        %v2814 = vpop.f32.mrf.mxu0
        %v2815 = vadd.f32 0.0, %v2814
        %2816 = vmatmul.f32.gmra.mxu0 %v2690
        %v2817 = vpop.f32.mrf.mxu0
        %v2818 = vadd.f32 0.0, %v2817
        %2819 = vmatmul.f32.gmra.mxu0 %v2693
        %v2820 = vpop.f32.mrf.mxu0
        %v2821 = vadd.f32 0.0, %v2820
        %2822 = vmatmul.f32.gmra.mxu0 %v2696
        %v2823 = vpop.f32.mrf.mxu0
        %v2824 = vadd.f32 0.0, %v2823
        %2825 = vmatmul.f32.gmra.mxu0 %v2699
        %v2826 = vpop.f32.mrf.mxu0
        %v2827 = vadd.f32 0.0, %v2826
        %2828 = vmatmul.f32.gmra.mxu0 %v2702
        %v2829 = vpop.f32.mrf.mxu0
        %v2830 = vadd.f32 0.0, %v2829
        %2831 = vmatmul.f32.gmra.mxu0 %v2705
        %v2832 = vpop.f32.mrf.mxu0
        %v2833 = vadd.f32 0.0, %v2832
        %2834 = vmatmul.f32.gmra.mxu0 %v2708
        %v2835 = vpop.f32.mrf.mxu0
        %v2836 = vadd.f32 0.0, %v2835
        %2837 = vmatmul.f32.gmra.mxu0 %v2711
        %v2838 = vpop.f32.mrf.mxu0
        %v2839 = vadd.f32 0.0, %v2838
        %2840 = vmatmul.f32.gmra.mxu0 %v2714
        %v2841 = vpop.f32.mrf.mxu0
        %v2842 = vadd.f32 0.0, %v2841
        %2843 = vmatmul.f32.gmra.mxu0 %v2717
        %v2844 = vpop.f32.mrf.mxu0
        %v2845 = vadd.f32 0.0, %v2844
        %2846 = vmatmul.f32.gmra.mxu0 %v2720
        %v2847 = vpop.f32.mrf.mxu0
        %v2848 = vadd.f32 0.0, %v2847
        %2849 = vmatmul.f32.gmra.mxu0 %v2723
        %v2850 = vpop.f32.mrf.mxu0
        %v2851 = vadd.f32 0.0, %v2850
        %2852 = vmatmul.f32.gmra.mxu0 %v2726
        %v2853 = vpop.f32.mrf.mxu0
        %v2854 = vadd.f32 0.0, %v2853
        %2855 = vmatmul.f32.gmra.mxu0 %v2729
        %v2856 = vpop.f32.mrf.mxu0
        %v2857 = vadd.f32 0.0, %v2856
        %2858 = vmatmul.f32.gmra.mxu0 %v2732
        %v2859 = vpop.f32.mrf.mxu0
        %v2860 = vadd.f32 0.0, %v2859
        %2861 = vmatmul.f32.gmra.mxu0 %v2735
        %v2862 = vpop.f32.mrf.mxu0
        %v2863 = vadd.f32 0.0, %v2862
        %2864 = vmatmul.f32.gmra.mxu0 %v2738
        %v2865 = vpop.f32.mrf.mxu0
        %v2866 = vadd.f32 0.0, %v2865
        %2867 = vmatmul.f32.gmra.mxu0 %v2741
        %v2868 = vpop.f32.mrf.mxu0
        %v2869 = vadd.f32 0.0, %v2868
        %2870 = vmatmul.f32.gmra.mxu0 %v2744
        %v2871 = vpop.f32.mrf.mxu0
        %v2872 = vadd.f32 0.0, %v2871
        %2873 = vmatmul.f32.gmra.mxu0 %v2747
        %v2874 = vpop.f32.mrf.mxu0
        %v2875 = vadd.f32 0.0, %v2874
        %2876 = vmatmul.f32.gmra.mxu0 %v2750
        %v2877 = vpop.f32.mrf.mxu0
        %v2878 = vadd.f32 0.0, %v2877
        %2879 = vmatmul.f32.gmra.mxu0 %v2753
        %v2880 = vpop.f32.mrf.mxu0
        %v2881 = vadd.f32 0.0, %v2880
        %2882 = vmatmul.f32.gmra.mxu0 %v2756
        %v2883 = vpop.f32.mrf.mxu0
        %v2884 = vadd.f32 0.0, %v2883
        %2885 = vmatmul.f32.gmra.mxu0 %v2759
        %v2886 = vpop.f32.mrf.mxu0
        %v2887 = vadd.f32 0.0, %v2886
        %2888 = vmatmul.f32.gmra.mxu0 %v2762
        %v2889 = vpop.f32.mrf.mxu0
        %v2890 = vadd.f32 0.0, %v2889
        %2891 = vmatmul.f32.gmra.mxu0 %v2765
        %v2892 = vpop.f32.mrf.mxu0
        %v2893 = vadd.f32 0.0, %v2892
        %2894 = vmatmul.f32.gmra.mxu0 %v2768
        %v2895 = vpop.f32.mrf.mxu0
        %v2896 = vadd.f32 0.0, %v2895
        %2897 = vmatmul.f32.gmra.mxu0 %v2771
        %v2898 = vpop.f32.mrf.mxu0
        %v2899 = vadd.f32 0.0, %v2898
        %2900 = vmatmul.f32.gmra.mxu0 %v2774
        %v2901 = vpop.f32.mrf.mxu0
        %v2902 = vadd.f32 0.0, %v2901
        %2903 = vmatmul.f32.gmra.mxu0 %v2777
        %v2904 = vpop.f32.mrf.mxu0
        %v2905 = vadd.f32 0.0, %v2904
        %2906 = vmatmul.f32.gmra.mxu0 %v2780
        %v2907 = vpop.f32.mrf.mxu0
        %v2908 = vadd.f32 0.0, %v2907
        %2909 = vmatmul.f32.gmra.mxu0 %v2783
        %v2910 = vpop.f32.mrf.mxu0
        %v2911 = vadd.f32 0.0, %v2910
        %2912 = vmatmul.f32.gmra.mxu0 %v2786
        %v2913 = vpop.f32.mrf.mxu0
        %v2914 = vadd.f32 0.0, %v2913
        %2915 = vmatmul.f32.gmra.mxu0 %v2789
        %v2916 = vpop.f32.mrf.mxu0
        %v2917 = vadd.f32 0.0, %v2916
        %2918 = vmatmul.f32.gmra.mxu0 %v2792
        %v2919 = vpop.f32.mrf.mxu0
        %v2920 = vadd.f32 0.0, %v2919
        %2921 = vdwg.mxu0
        %v2922 = vadd.f32 %v2612, %v2815
        %v2923 = vadd.f32 %v2613, %v2818
        %v2924 = vadd.f32 %v2614, %v2821
        %v2925 = vadd.f32 %v2615, %v2824
        %v2926 = vadd.f32 %v2616, %v2827
        %v2927 = vadd.f32 %v2617, %v2830
        %v2928 = vadd.f32 %v2618, %v2833
        %v2929 = vadd.f32 %v2619, %v2836
        %v2930 = vadd.f32 %v2620, %v2839
        %v2931 = vadd.f32 %v2621, %v2842
        %v2932 = vadd.f32 %v2622, %v2845
        %v2933 = vadd.f32 %v2623, %v2848
        %v2934 = vadd.f32 %v2624, %v2851
        %v2935 = vadd.f32 %v2625, %v2854
        %v2936 = vadd.f32 %v2626, %v2857
        %v2937 = vadd.f32 %v2627, %v2860
        %v2938 = vadd.f32 %v2628, %v2863
        %v2939 = vadd.f32 %v2629, %v2866
        %v2940 = vadd.f32 %v2630, %v2869
        %v2941 = vadd.f32 %v2631, %v2872
        %v2942 = vadd.f32 %v2632, %v2875
        %v2943 = vadd.f32 %v2633, %v2878
        %v2944 = vadd.f32 %v2634, %v2881
        %v2945 = vadd.f32 %v2635, %v2884
        %v2946 = vadd.f32 %v2636, %v2887
        %v2947 = vadd.f32 %v2637, %v2890
        %v2948 = vadd.f32 %v2638, %v2893
        %v2949 = vadd.f32 %v2639, %v2896
        %v2950 = vadd.f32 %v2640, %v2899
        %v2951 = vadd.f32 %v2641, %v2902
        %v2952 = vadd.f32 %v2642, %v2905
        %v2953 = vadd.f32 %v2643, %v2908
        %v2954 = vadd.f32 %v2644, %v2911
        %v2955 = vadd.f32 %v2645, %v2914
        %v2956 = vadd.f32 %v2646, %v2917
        %v2957 = vadd.f32 %v2647, %v2920
        %2958 = vst [vmem:[%s221] sm:$0xff] %v2922
        %2959 = vst [vmem:[%s221 + $0x8] sm:$0xff] %v2923
        %2960 = vst [vmem:[%s221 + $0x10] sm:$0xff] %v2924
        %2961 = vst [vmem:[%s221 + $0x18] sm:$0xff] %v2925
        %2962 = vst [vmem:[%s221 + $0x20] sm:$0xff] %v2926
        %2963 = vst [vmem:[%s221 + $0x28] sm:$0xff] %v2927
        %2964 = vst [vmem:[%s221 + $0x30] sm:$0xff] %v2928
        %2965 = vst [vmem:[%s221 + $0x38] sm:$0xff] %v2929
        %2966 = vst [vmem:[%s221 + $0x40] sm:$0xff] %v2930
        %2967 = vst [vmem:[%s221 + $0x48] sm:$0xff] %v2931
        %2968 = vst [vmem:[%s221 + $0x50] sm:$0xff] %v2932
        %2969 = vst [vmem:[%s221 + $0x58] sm:$0xff] %v2933
        %2970 = vst [vmem:[%s221 + $0x60] sm:$0xff] %v2934
        %2971 = vst [vmem:[%s221 + $0x68] sm:$0xff] %v2935
        %2972 = vst [vmem:[%s221 + $0x70] sm:$0xff] %v2936
        %2973 = vst [vmem:[%s221 + $0x78] sm:$0xff] %v2937
        %2974 = vst [vmem:[%s221 + $0x80] sm:$0xff] %v2938
        %2975 = vst [vmem:[%s221 + $0x88] sm:$0xff] %v2939
        %2976 = vst [vmem:[%s221 + $0x90] sm:$0xff] %v2940
        %2977 = vst [vmem:[%s221 + $0x98] sm:$0xff] %v2941
        %2978 = vst [vmem:[%s221 + $0xa0] sm:$0xff] %v2942
        %2979 = vst [vmem:[%s221 + $0xa8] sm:$0xff] %v2943
        %2980 = vst [vmem:[%s221 + $0xb0] sm:$0xff] %v2944
        %2981 = vst [vmem:[%s221 + $0xb8] sm:$0xff] %v2945
        %2982 = vst [vmem:[%s221 + $0xc0] sm:$0xff] %v2946
        %2983 = vst [vmem:[%s221 + $0xc8] sm:$0xff] %v2947
        %2984 = vst [vmem:[%s221 + $0xd0] sm:$0xff] %v2948
        %2985 = vst [vmem:[%s221 + $0xd8] sm:$0xff] %v2949
        %2986 = vst [vmem:[%s221 + $0xe0] sm:$0xff] %v2950
        %2987 = vst [vmem:[%s221 + $0xe8] sm:$0xff] %v2951
        %2988 = vst [vmem:[%s221 + $0xf0] sm:$0xff] %v2952
        %2989 = vst [vmem:[%s221 + $0xf8] sm:$0xff] %v2953
        %2990 = vst [vmem:[%s221 + $0x100] sm:$0xff] %v2954
        %2991 = vst [vmem:[%s221 + $0x108] sm:$0xff] %v2955
        %2992 = vst [vmem:[%s221 + $0x110] sm:$0xff] %v2956
        %2993 = vst [vmem:[%s221 + $0x118] sm:$0xff] %v2957
        %v2994 = vld [vmem:[%s2] sm:$0xff]
        %v2995 = vld [vmem:[%s2 + $0x8] sm:$0xff]
        %v2996 = vld [vmem:[%s2 + $0x10] sm:$0xff]
        %v2997 = vld [vmem:[%s2 + $0x18] sm:$0xff]
        %v2998 = vld [vmem:[%s2 + $0x20] sm:$0xff]
        %v2999 = vld [vmem:[%s2 + $0x28] sm:$0xff]
        %v3000 = vld [vmem:[%s2 + $0x30] sm:$0xff]
        %v3001 = vld [vmem:[%s2 + $0x38] sm:$0xff]
        %v3002 = vld [vmem:[%s2 + $0x40] sm:$0xff]
        %v3003 = vld [vmem:[%s2 + $0x48] sm:$0xff]
        %v3004 = vld [vmem:[%s2 + $0x50] sm:$0xff]
        %v3005 = vld [vmem:[%s2 + $0x58] sm:$0xff]
        %v3006 = vld [vmem:[%s2 + $0x60] sm:$0xff]
        %v3007 = vld [vmem:[%s2 + $0x68] sm:$0xff]
        %v3008 = vld [vmem:[%s2 + $0x70] sm:$0xff]
        %v3009 = vld [vmem:[%s2 + $0x78] sm:$0xff]
        %v3010 = vld [vmem:[%s2 + $0x80] sm:$0xff]
        %v3011 = vld [vmem:[%s2 + $0x88] sm:$0xff]
        %v3012 = vld [vmem:[%s2 + $0x90] sm:$0xff]
        %v3013 = vld [vmem:[%s2 + $0x98] sm:$0xff]
        %v3014 = vld [vmem:[%s2 + $0xa0] sm:$0xff]
        %v3015 = vld [vmem:[%s2 + $0xa8] sm:$0xff]
        %v3016 = vld [vmem:[%s2 + $0xb0] sm:$0xff]
        %v3017 = vld [vmem:[%s2 + $0xb8] sm:$0xff]
        %v3018 = vld [vmem:[%s2 + $0xc0] sm:$0xff]
        %v3019 = vld [vmem:[%s2 + $0xc8] sm:$0xff]
        %v3020 = vld [vmem:[%s2 + $0xd0] sm:$0xff]
        %v3021 = vld [vmem:[%s2 + $0xd8] sm:$0xff]
        %v3022 = vld [vmem:[%s2 + $0xe0] sm:$0xff]
        %v3023 = vld [vmem:[%s2 + $0xe8] sm:$0xff]
        %v3024 = vld [vmem:[%s2 + $0xf0] sm:$0xff]
        %v3025 = vld [vmem:[%s2 + $0xf8] sm:$0xff]
        %v3026 = vld [vmem:[%s2 + $0x100] sm:$0xff]
        %v3027 = vld [vmem:[%s2 + $0x108] sm:$0xff]
        %v3028 = vld [vmem:[%s2 + $0x110] sm:$0xff]
        %v3029 = vld [vmem:[%s2 + $0x118] sm:$0xff]
        %3031 = vset.pattern.permute.xlu0 0
        %3032 = vperm.xlu0 %3031, %v2994
        %v3033 = vpop.permute.xlu0 %3032
        %3036 = vset.pattern.permute.xlu0 0
        %3037 = vperm.xlu0 %3036, %v2995
        %v3038 = vpop.permute.xlu0 %3037
        %3041 = vset.pattern.permute.xlu0 0
        %3042 = vperm.xlu0 %3041, %v2996
        %v3043 = vpop.permute.xlu0 %3042
        %3046 = vset.pattern.permute.xlu0 0
        %3047 = vperm.xlu0 %3046, %v2997
        %v3048 = vpop.permute.xlu0 %3047
        %3051 = vset.pattern.permute.xlu0 0
        %3052 = vperm.xlu0 %3051, %v2998
        %v3053 = vpop.permute.xlu0 %3052
        %3056 = vset.pattern.permute.xlu0 0
        %3057 = vperm.xlu0 %3056, %v2999
        %v3058 = vpop.permute.xlu0 %3057
        %3061 = vset.pattern.permute.xlu0 0
        %3062 = vperm.xlu0 %3061, %v3000
        %v3063 = vpop.permute.xlu0 %3062
        %3066 = vset.pattern.permute.xlu0 0
        %3067 = vperm.xlu0 %3066, %v3001
        %v3068 = vpop.permute.xlu0 %3067
        %3071 = vset.pattern.permute.xlu0 0
        %3072 = vperm.xlu0 %3071, %v3002
        %v3073 = vpop.permute.xlu0 %3072
        %3076 = vset.pattern.permute.xlu0 0
        %3077 = vperm.xlu0 %3076, %v3003
        %v3078 = vpop.permute.xlu0 %3077
        %3081 = vset.pattern.permute.xlu0 0
        %3082 = vperm.xlu0 %3081, %v3004
        %v3083 = vpop.permute.xlu0 %3082
        %3086 = vset.pattern.permute.xlu0 0
        %3087 = vperm.xlu0 %3086, %v3005
        %v3088 = vpop.permute.xlu0 %3087
        %3091 = vset.pattern.permute.xlu0 0
        %3092 = vperm.xlu0 %3091, %v3006
        %v3093 = vpop.permute.xlu0 %3092
        %3096 = vset.pattern.permute.xlu0 0
        %3097 = vperm.xlu0 %3096, %v3007
        %v3098 = vpop.permute.xlu0 %3097
        %3101 = vset.pattern.permute.xlu0 0
        %3102 = vperm.xlu0 %3101, %v3008
        %v3103 = vpop.permute.xlu0 %3102
        %3106 = vset.pattern.permute.xlu0 0
        %3107 = vperm.xlu0 %3106, %v3009
        %v3108 = vpop.permute.xlu0 %3107
        %3111 = vset.pattern.permute.xlu0 0
        %3112 = vperm.xlu0 %3111, %v3010
        %v3113 = vpop.permute.xlu0 %3112
        %3116 = vset.pattern.permute.xlu0 0
        %3117 = vperm.xlu0 %3116, %v3011
        %v3118 = vpop.permute.xlu0 %3117
        %3121 = vset.pattern.permute.xlu0 0
        %3122 = vperm.xlu0 %3121, %v3012
        %v3123 = vpop.permute.xlu0 %3122
        %3126 = vset.pattern.permute.xlu0 0
        %3127 = vperm.xlu0 %3126, %v3013
        %v3128 = vpop.permute.xlu0 %3127
        %3131 = vset.pattern.permute.xlu0 0
        %3132 = vperm.xlu0 %3131, %v3014
        %v3133 = vpop.permute.xlu0 %3132
        %3136 = vset.pattern.permute.xlu0 0
        %3137 = vperm.xlu0 %3136, %v3015
        %v3138 = vpop.permute.xlu0 %3137
        %3141 = vset.pattern.permute.xlu0 0
        %3142 = vperm.xlu0 %3141, %v3016
        %v3143 = vpop.permute.xlu0 %3142
        %3146 = vset.pattern.permute.xlu0 0
        %3147 = vperm.xlu0 %3146, %v3017
        %v3148 = vpop.permute.xlu0 %3147
        %3151 = vset.pattern.permute.xlu0 0
        %3152 = vperm.xlu0 %3151, %v3018
        %v3153 = vpop.permute.xlu0 %3152
        %3156 = vset.pattern.permute.xlu0 0
        %3157 = vperm.xlu0 %3156, %v3019
        %v3158 = vpop.permute.xlu0 %3157
        %3161 = vset.pattern.permute.xlu0 0
        %3162 = vperm.xlu0 %3161, %v3020
        %v3163 = vpop.permute.xlu0 %3162
        %3166 = vset.pattern.permute.xlu0 0
        %3167 = vperm.xlu0 %3166, %v3021
        %v3168 = vpop.permute.xlu0 %3167
        %3171 = vset.pattern.permute.xlu0 0
        %3172 = vperm.xlu0 %3171, %v3022
        %v3173 = vpop.permute.xlu0 %3172
        %3176 = vset.pattern.permute.xlu0 0
        %3177 = vperm.xlu0 %3176, %v3023
        %v3178 = vpop.permute.xlu0 %3177
        %3181 = vset.pattern.permute.xlu0 0
        %3182 = vperm.xlu0 %3181, %v3024
        %v3183 = vpop.permute.xlu0 %3182
        %3186 = vset.pattern.permute.xlu0 0
        %3187 = vperm.xlu0 %3186, %v3025
        %v3188 = vpop.permute.xlu0 %3187
        %3191 = vset.pattern.permute.xlu0 0
        %3192 = vperm.xlu0 %3191, %v3026
        %v3193 = vpop.permute.xlu0 %3192
        %3196 = vset.pattern.permute.xlu0 0
        %3197 = vperm.xlu0 %3196, %v3027
        %v3198 = vpop.permute.xlu0 %3197
        %3201 = vset.pattern.permute.xlu0 0
        %3202 = vperm.xlu0 %3201, %v3028
        %v3203 = vpop.permute.xlu0 %3202
        %3206 = vset.pattern.permute.xlu0 0
        %3207 = vperm.xlu0 %3206, %v3029
        %v3208 = vpop.permute.xlu0 %3207
        %v3210 = vmul.f32 %v2922, %v3033
        %v3211 = vmul.f32 %v2923, %v3038
        %v3212 = vmul.f32 %v2924, %v3043
        %v3213 = vmul.f32 %v2925, %v3048
        %v3214 = vmul.f32 %v2926, %v3053
        %v3215 = vmul.f32 %v2927, %v3058
        %v3216 = vmul.f32 %v2928, %v3063
        %v3217 = vmul.f32 %v2929, %v3068
        %v3218 = vmul.f32 %v2930, %v3073
        %v3219 = vmul.f32 %v2931, %v3078
        %v3220 = vmul.f32 %v2932, %v3083
        %v3221 = vmul.f32 %v2933, %v3088
        %v3222 = vmul.f32 %v2934, %v3093
        %v3223 = vmul.f32 %v2935, %v3098
        %v3224 = vmul.f32 %v2936, %v3103
        %v3225 = vmul.f32 %v2937, %v3108
        %v3226 = vmul.f32 %v2938, %v3113
        %v3227 = vmul.f32 %v2939, %v3118
        %v3228 = vmul.f32 %v2940, %v3123
        %v3229 = vmul.f32 %v2941, %v3128
        %v3230 = vmul.f32 %v2942, %v3133
        %v3231 = vmul.f32 %v2943, %v3138
        %v3232 = vmul.f32 %v2944, %v3143
        %v3233 = vmul.f32 %v2945, %v3148
        %v3234 = vmul.f32 %v2946, %v3153
        %v3235 = vmul.f32 %v2947, %v3158
        %v3236 = vmul.f32 %v2948, %v3163
        %v3237 = vmul.f32 %v2949, %v3168
        %v3238 = vmul.f32 %v2950, %v3173
        %v3239 = vmul.f32 %v2951, %v3178
        %v3240 = vmul.f32 %v2952, %v3183
        %v3241 = vmul.f32 %v2953, %v3188
        %v3242 = vmul.f32 %v2954, %v3193
        %v3243 = vmul.f32 %v2955, %v3198
        %v3244 = vmul.f32 %v2956, %v3203
        %v3245 = vmul.f32 %v2957, %v3208
        %v3246 = vadd.f32 %v3210, %v3211
        %v3247 = vadd.f32 %v3246, %v3212
        %v3248 = vadd.f32 %v3247, %v3213
        %v3249 = vadd.f32 %v3248, %v3214
        %v3250 = vadd.f32 %v3249, %v3215
        %v3251 = vadd.f32 %v3250, %v3216
        %v3252 = vadd.f32 %v3251, %v3217
        %v3253 = vadd.f32 %v3252, %v3218
        %v3254 = vadd.f32 %v3253, %v3219
        %v3255 = vadd.f32 %v3254, %v3220
        %v3256 = vadd.f32 %v3255, %v3221
        %v3257 = vadd.f32 %v3256, %v3222
        %v3258 = vadd.f32 %v3257, %v3223
        %v3259 = vadd.f32 %v3258, %v3224
        %v3260 = vadd.f32 %v3259, %v3225
        %v3261 = vadd.f32 %v3260, %v3226
        %v3262 = vadd.f32 %v3261, %v3227
        %v3263 = vadd.f32 %v3262, %v3228
        %v3264 = vadd.f32 %v3263, %v3229
        %v3265 = vadd.f32 %v3264, %v3230
        %v3266 = vadd.f32 %v3265, %v3231
        %v3267 = vadd.f32 %v3266, %v3232
        %v3268 = vadd.f32 %v3267, %v3233
        %v3269 = vadd.f32 %v3268, %v3234
        %v3270 = vadd.f32 %v3269, %v3235
        %v3271 = vadd.f32 %v3270, %v3236
        %v3272 = vadd.f32 %v3271, %v3237
        %v3273 = vadd.f32 %v3272, %v3238
        %v3274 = vadd.f32 %v3273, %v3239
        %v3275 = vadd.f32 %v3274, %v3240
        %v3276 = vadd.f32 %v3275, %v3241
        %v3277 = vadd.f32 %v3276, %v3242
        %v3278 = vadd.f32 %v3277, %v3243
        %v3279 = vadd.f32 %v3278, %v3244
        %v3280 = vadd.f32 %v3279, %v3245
        %v3281 = vrot.slane %v3280, 4
        %v3282 = vadd.f32 %v3280, %v3281
        %v3283 = vrot.slane %v3282, 2
        %v3284 = vadd.f32 %v3282, %v3283
        %v3285 = vrot.slane %v3284, 1
        %v3286 = vadd.f32 %v3284, %v3285
        %3287 = vst [vmem:[%s227] sm:$0x1] %v3286
        %v3288 = vmul.f32 %v3210, %v3210
        %v3289 = vmul.f32 %v3211, %v3211
        %v3290 = vmul.f32 %v3212, %v3212
        %v3291 = vmul.f32 %v3213, %v3213
        %v3292 = vmul.f32 %v3214, %v3214
        %v3293 = vmul.f32 %v3215, %v3215
        %v3294 = vmul.f32 %v3216, %v3216
        %v3295 = vmul.f32 %v3217, %v3217
        %v3296 = vmul.f32 %v3218, %v3218
        %v3297 = vmul.f32 %v3219, %v3219
        %v3298 = vmul.f32 %v3220, %v3220
        %v3299 = vmul.f32 %v3221, %v3221
        %v3300 = vmul.f32 %v3222, %v3222
        %v3301 = vmul.f32 %v3223, %v3223
        %v3302 = vmul.f32 %v3224, %v3224
        %v3303 = vmul.f32 %v3225, %v3225
        %v3304 = vmul.f32 %v3226, %v3226
        %v3305 = vmul.f32 %v3227, %v3227
        %v3306 = vmul.f32 %v3228, %v3228
        %v3307 = vmul.f32 %v3229, %v3229
        %v3308 = vmul.f32 %v3230, %v3230
        %v3309 = vmul.f32 %v3231, %v3231
        %v3310 = vmul.f32 %v3232, %v3232
        %v3311 = vmul.f32 %v3233, %v3233
        %v3312 = vmul.f32 %v3234, %v3234
        %v3313 = vmul.f32 %v3235, %v3235
        %v3314 = vmul.f32 %v3236, %v3236
        %v3315 = vmul.f32 %v3237, %v3237
        %v3316 = vmul.f32 %v3238, %v3238
        %v3317 = vmul.f32 %v3239, %v3239
        %v3318 = vmul.f32 %v3240, %v3240
        %v3319 = vmul.f32 %v3241, %v3241
        %v3320 = vmul.f32 %v3242, %v3242
        %v3321 = vmul.f32 %v3243, %v3243
        %v3322 = vmul.f32 %v3244, %v3244
        %v3323 = vmul.f32 %v3245, %v3245
        %v3324 = vadd.f32 %v3288, %v3289
        %v3325 = vadd.f32 %v3324, %v3290
        %v3326 = vadd.f32 %v3325, %v3291
        %v3327 = vadd.f32 %v3326, %v3292
        %v3328 = vadd.f32 %v3327, %v3293
        %v3329 = vadd.f32 %v3328, %v3294
        %v3330 = vadd.f32 %v3329, %v3295
        %v3331 = vadd.f32 %v3330, %v3296
        %v3332 = vadd.f32 %v3331, %v3297
        %v3333 = vadd.f32 %v3332, %v3298
        %v3334 = vadd.f32 %v3333, %v3299
        %v3335 = vadd.f32 %v3334, %v3300
        %v3336 = vadd.f32 %v3335, %v3301
        %v3337 = vadd.f32 %v3336, %v3302
        %v3338 = vadd.f32 %v3337, %v3303
        %v3339 = vadd.f32 %v3338, %v3304
        %v3340 = vadd.f32 %v3339, %v3305
        %v3341 = vadd.f32 %v3340, %v3306
        %v3342 = vadd.f32 %v3341, %v3307
        %v3343 = vadd.f32 %v3342, %v3308
        %v3344 = vadd.f32 %v3343, %v3309
        %v3345 = vadd.f32 %v3344, %v3310
        %v3346 = vadd.f32 %v3345, %v3311
        %v3347 = vadd.f32 %v3346, %v3312
        %v3348 = vadd.f32 %v3347, %v3313
        %v3349 = vadd.f32 %v3348, %v3314
        %v3350 = vadd.f32 %v3349, %v3315
        %v3351 = vadd.f32 %v3350, %v3316
        %v3352 = vadd.f32 %v3351, %v3317
        %v3353 = vadd.f32 %v3352, %v3318
        %v3354 = vadd.f32 %v3353, %v3319
        %v3355 = vadd.f32 %v3354, %v3320
        %v3356 = vadd.f32 %v3355, %v3321
        %v3357 = vadd.f32 %v3356, %v3322
        %v3358 = vadd.f32 %v3357, %v3323
        %v3359 = vrot.slane %v3358, 4
        %v3360 = vadd.f32 %v3358, %v3359
        %v3361 = vrot.slane %v3360, 2
        %v3362 = vadd.f32 %v3360, %v3361
        %v3363 = vrot.slane %v3362, 1
        %v3364 = vadd.f32 %v3362, %v3363
        %3365 = vst [vmem:[%s233] sm:$0x1] %v3364
        %s3366 = sand.u32 %s99, 1
        %s3367 = scalar_lea.sflag [#allocation3], %s3366
        %s3368 = sand.u32 %s99, 1
        %s3369 = smul.addr %s3368, 288
        %s3370 = scalar_lea.vmem [#allocation2], %s3369
        %s3371 = sand.u32 %s23, 1
        %s3372 = scalar_lea.sflag [#allocation5], %s3371
        %s3373 = sand.u32 %s125, 1
        %s3374 = scalar_lea.vmem [#allocation4], %s3373
        %s3375 = sand.u32 %s23, 1
        %s3376 = scalar_lea.sflag [#allocation5], %s3375
        %s3377 = sand.u32 %s151, 1
        %s3378 = scalar_lea.vmem [#allocation6], %s3377
        // Predicated region
        $region33: #{tpu_custom_call.1} parent=31 // pred_check
          %p3379 = pneg %p109
        $region34: #{tpu_custom_call.1} parent=31 // pred_check_branch
          %3381 = sbr.rel (%p3379) target = $region36
        $region35: #{tpu_custom_call.1} parent=31 // pred_region
          %3383 = vsyncadd %s3367, 0
          %s3384 = smul.addr %s23, 36
          %s3385 = smul.addr %s3384, 8
          %s3386 = scalar_lea.hbm %s3, %s3385
          %s3387 = sshll.u32 %s3370, 4
          %s3388 = int_to_ptr.vmem [resolvable:$true] %s3387
          %s3389 = sshll.u32 %s3386, 4
          %s3390 = int_to_ptr.hbm [resolvable:$true] %s3389
          %3395 = dma.vmem_to_hbm [thread:$0]  %s3388, 4608, %s3390, %s3367, 128, 128, 8
        $region36: #{tpu_custom_call.1} parent=31 // pred_fallthru
          _
        // Predicated region
        $region37: #{tpu_custom_call.1} parent=31 // pred_check
          %p3396 = pneg %p135
        $region38: #{tpu_custom_call.1} parent=31 // pred_check_branch
          %3398 = sbr.rel (%p3396) target = $region40
        $region39: #{tpu_custom_call.1} parent=31 // pred_region
          %3400 = vsyncadd %s3372, 0
          %s3401 = scalar_lea.hbm %s4, %s23
          %s3403 = sshll.u32 %s3374, 4
          %s3404 = int_to_ptr.vmem [resolvable:$true] %s3403
          %s3405 = sshll.u32 %s3401, 4
          %s3406 = int_to_ptr.hbm [resolvable:$true] %s3405
          %3408 = dma.vmem_to_hbm [thread:$0]  %s3404, 16, %s3406, %s3372
        $region40: #{tpu_custom_call.1} parent=31 // pred_fallthru
          _
        // Predicated region
        $region41: #{tpu_custom_call.1} parent=31 // pred_check
          %p3409 = pneg %p161
        $region42: #{tpu_custom_call.1} parent=31 // pred_check_branch
          %3411 = sbr.rel (%p3409) target = $region44
        $region43: #{tpu_custom_call.1} parent=31 // pred_region
          %3413 = vsyncadd %s3376, 0
          %s3414 = scalar_lea.hbm %s5, %s23
          %s3416 = sshll.u32 %s3378, 4
          %s3417 = int_to_ptr.vmem [resolvable:$true] %s3416
          %s3418 = sshll.u32 %s3414, 4
          %s3419 = int_to_ptr.hbm [resolvable:$true] %s3418
          %3421 = dma.vmem_to_hbm [thread:$0]  %s3417, 16, %s3419, %s3376
        $region44: #{tpu_custom_call.1} parent=31 // pred_fallthru
          _
      $region32: #{tpu_custom_call.1} parent=5 // pred_fallthru
        _
      %p3422 = scmp.le.s32.totalorder 2, %s18
      // Predicated region
      $region45: #{tpu_custom_call.1} parent=5 // pred_check
        %p3423 = pneg %p3422
      $region46: #{tpu_custom_call.1} parent=5 // pred_check_branch
        %3425 = sbr.rel (%p3423) target = $region48
      $region47: #{tpu_custom_call.1} parent=5 // pred_region
        %s3426 = ssub.s32 %s18, 2
        // Predicated region
        $region49: #{tpu_custom_call.1} parent=47 // pred_check
          %p3427 = pneg %p115
        $region50: #{tpu_custom_call.1} parent=47 // pred_check_branch
          %3429 = sbr.rel (%p3427) target = $region52
        $region51: #{tpu_custom_call.1} parent=47 // pred_region
          %s3430 = sand.u32 %s100, 1
          %s3431 = scalar_lea.sflag [#allocation3], %s3430
          %s3432 = sand.u32 %s100, 1
          %s3433 = smul.addr %s3432, 288
          %s3434 = scalar_lea.vmem [#allocation2], %s3433
          %3436 = dma.done %s3431, 4608
        $region52: #{tpu_custom_call.1} parent=47 // pred_fallthru
          _
        // Predicated region
        $region53: #{tpu_custom_call.1} parent=47 // pred_check
          %p3437 = pneg %p141
        $region54: #{tpu_custom_call.1} parent=47 // pred_check_branch
          %3439 = sbr.rel (%p3437) target = $region56
        $region55: #{tpu_custom_call.1} parent=47 // pred_region
          %s3440 = sand.u32 %s24, 1
          %s3441 = scalar_lea.sflag [#allocation5], %s3440
          %s3442 = sand.u32 %s126, 1
          %s3443 = scalar_lea.vmem [#allocation4], %s3442
          %3445 = dma.done %s3441, 16
        $region56: #{tpu_custom_call.1} parent=47 // pred_fallthru
          _
        // Predicated region
        $region57: #{tpu_custom_call.1} parent=47 // pred_check
          %p3446 = pneg %p167
        $region58: #{tpu_custom_call.1} parent=47 // pred_check_branch
          %3448 = sbr.rel (%p3446) target = $region60
        $region59: #{tpu_custom_call.1} parent=47 // pred_region
          %s3449 = sand.u32 %s24, 1
          %s3450 = scalar_lea.sflag [#allocation5], %s3449
          %s3451 = sand.u32 %s152, 1
          %s3452 = scalar_lea.vmem [#allocation6], %s3451
          %3454 = dma.done %s3450, 16
        $region60: #{tpu_custom_call.1} parent=47 // pred_fallthru
          _
      $region48: #{tpu_custom_call.1} parent=5 // pred_fallthru
        _
    $region6: #{tpu_custom_call.1} parent=1 // loop_footer
      %s22 = sadd.s32 1, %s18
    $region7: #{tpu_custom_call.1} parent=1 // loop_footer_branch
      %17 = sbr.rel target = $region3
    $region8: #{tpu_custom_call.1} parent=1 // loop_exit
      _
    %3455 = vsyncpa [#allocation3], 1
    %s3456 = scalar_lea.sflag [#allocation3], 1
    %3457 = vsyncpa %s3456, 1
    %3458 = vsyncpa [#allocation5], 1
    %s3459 = scalar_lea.sflag [#allocation5], 1
    %3460 = vsyncpa %s3459, 1

</llo_original>
